<compile_context>
chip_gen: v6e
topology: v6e:2x2x1
jax: 0.10.0
libtpu: 0.0.40
codegen_flags: <defaults>
</compile_context>

<pallas_src>
import functools

import jax
import jax.numpy as jnp
from jax import lax
from jax.experimental import pallas as pl
from jax.experimental.pallas import tpu as pltpu

EPS = 1e-5  # PyTorch LayerNorm default


# ---------------------------------------------------------------------------
# Small helpers
# ---------------------------------------------------------------------------
def _pick_block(n, target, multiple=1):
    """Largest divisor of n that is <= target and a multiple of `multiple`.

    Falls back to the full extent when n is small (block == full dim is always
    legal for the tiled dims).
    """
    if n <= target:
        return n
    for d in range(target, 0, -1):
        if n % d == 0 and d % multiple == 0:
            return d
    return n


def _nbytes(shape, dtype):
    n = 1
    for s in shape:
        n *= int(s)
    return n * jnp.dtype(dtype).itemsize


def _vmem_limit(block_bytes):
    """Scoped VMEM request: assume every block is double-buffered, add
    headroom, clamp so it fits all generations (v7x: 64 MiB per TensorCore)."""
    need = 2 * int(sum(block_bytes)) + (2 << 20)
    return int(min(max(need, 8 << 20), 48 << 20))


# ---------------------------------------------------------------------------
# Kernel 1: fused Q/K/V projection on a (rows, D) token slab
# ---------------------------------------------------------------------------
def qkv_proj_kernel(x_ref, wqkv_ref, bqkv_ref, q_ref, k_ref, v_ref):
    # One (rows, D) x (D, 3D) bf16 MXU matmul, f32 accumulation.  The
    # 1/sqrt(dim_head) attention scale is pre-folded into the Q columns.
    D = q_ref.shape[-1]
    x = x_ref[...].astype(jnp.bfloat16)
    qkv = jnp.dot(x, wqkv_ref[...], preferred_element_type=jnp.float32)
    qkv = qkv + bqkv_ref[...]
    q_ref[...] = qkv[:, :D]
    k_ref[...] = qkv[:, D:2 * D]
    v_ref[...] = qkv[:, 2 * D:3 * D]


# ---------------------------------------------------------------------------
# Kernel 2: scaled-dot-product attention, batched over (batch * view-head)
# groups.  Blocks are (groups, L, dh); exact per-head (groups, L, L) scores,
# no block-diagonal mask, no redundant FLOPs.
# ---------------------------------------------------------------------------
def attention_kernel(q_ref, k_ref, v_ref, o_ref):
    q = q_ref[...].astype(jnp.bfloat16)       # scale already folded into Q
    k = k_ref[...].astype(jnp.bfloat16)
    v = v_ref[...].astype(jnp.bfloat16)
    # scores[g, i, j] = q[g, i, :] . k[g, j, :]
    s = lax.dot_general(q, k, (((2,), (2,)), ((0,), (0,))),
                        preferred_element_type=jnp.float32)       # (g, L, L)
    s = s - jnp.max(s, axis=-1, keepdims=True)
    e = jnp.exp(s)
    p = e / jnp.sum(e, axis=-1, keepdims=True)                    # exact softmax
    o_ref[...] = lax.dot_general(p.astype(jnp.bfloat16), v,
                                 (((2,), (1,)), ((0,), (0,))),
                                 preferred_element_type=jnp.float32)


# ---------------------------------------------------------------------------
# Kernel 3: output projection + residual + LayerNorm, then position-wise FFN
# + residual + LayerNorm, on a (rows, D) token slab.  Dropout(p=0) = identity.
# ---------------------------------------------------------------------------
def out_ffn_kernel(ctx_ref, x_ref, wo_ref, bo_ref, g1_ref, be1_ref,
                   w1_ref, b1_ref, w2_ref, b2_ref, g2_ref, be2_ref, o_ref):
    def layer_norm(y, g, b):
        # Single pass: E[x] and E[x^2] computed together (one reduction pair).
        mu = jnp.mean(y, axis=-1, keepdims=True)
        ms = jnp.mean(y * y, axis=-1, keepdims=True)
        var = jnp.maximum(ms - mu * mu, 0.0)
        return (y - mu) * lax.rsqrt(var + EPS) * g + b

    # Multi_Head_Attention tail: fc(context) -> (+ residual) -> LayerNorm
    proj = jnp.dot(ctx_ref[...].astype(jnp.bfloat16), wo_ref[...],
                   preferred_element_type=jnp.float32) + bo_ref[...]
    out1 = layer_norm(proj + x_ref[...], g1_ref[...], be1_ref[...])

    # Position_wise_Feed_Forward: fc1 -> relu -> fc2 -> (+ residual) -> LN
    h = jnp.dot(out1.astype(jnp.bfloat16), w1_ref[...],
                preferred_element_type=jnp.float32) + b1_ref[...]
    h = jnp.maximum(h, 0.0)
    ff = jnp.dot(h.astype(jnp.bfloat16), w2_ref[...],
                 preferred_element_type=jnp.float32) + b2_ref[...]
    o_ref[...] = layer_norm(ff + out1, g2_ref[...], be2_ref[...]).astype(o_ref.dtype)


# ---------------------------------------------------------------------------
# Wrapper
# ---------------------------------------------------------------------------
def encoder_forward(x, params, num_head):
    B, L, D = x.shape
    H = num_head
    assert D % H == 0
    dh = D // H
    R = B * L            # total token rows
    G = B * H            # total (batch * view-head) attention groups
    hidden = params["w1"].shape[1]
    scale = float(dh) ** -0.5

    f32, bf16 = jnp.float32, jnp.bfloat16

    # ---- weight prep (host/XLA side) ---------------------------------------
    # Fuse Q/K/V into one [D, 3D] weight; fold the attention scale into the Q
    # columns (mathematically identical to scaling the scores).
    wqkv = jnp.concatenate(
        [params["wq"] * scale, params["wk"], params["wv"]], axis=1).astype(bf16)
    bqkv = jnp.concatenate(
        [params["bq"] * scale, params["bk"], params["bv"]], axis=1).astype(f32)
    wo = params["wo"].astype(bf16)
    w1 = params["w1"].astype(bf16)
    w2 = params["w2"].astype(bf16)

    # Token rows: heavy matmuls run on (rows, D) slabs.
    x_rows = x.reshape(R, D)

    # Tile choices: target several hundred rows per grid step (v5e wants the
    # most); divisors keep the grid exact, multiples of 8 keep sublane tiling
    # happy.  For large B this gives a multi-step "parallel" grid so both v7x
    # TensorCores get work.
    Rt = _pick_block(R, 512, multiple=8)
    Gt = _pick_block(G, 256)

    # ---------------- call 1: fused QKV projection --------------------------
    blocks1 = [_nbytes((Rt, D), f32), _nbytes((D, 3 * D), bf16),
               _nbytes((1, 3 * D), f32), 3 * _nbytes((Rt, D), f32)]
    q_flat, k_flat, v_flat = pl.pallas_call(
        qkv_proj_kernel,
        grid=(R // Rt,),
        out_shape=tuple(jax.ShapeDtypeStruct((R, D), f32) for _ in range(3)),
        in_specs=[
            pl.BlockSpec((Rt, D), lambda i: (i, 0)),        # x rows
            pl.BlockSpec((D, 3 * D), lambda i: (0, 0)),     # wqkv (VMEM resident)
            pl.BlockSpec((1, 3 * D), lambda i: (0, 0)),     # bqkv
        ],
        out_specs=tuple(pl.BlockSpec((Rt, D), lambda i: (i, 0)) for _ in range(3)),
        compiler_params=pltpu.CompilerParams(
            dimension_semantics=("parallel",),
            vmem_limit_bytes=_vmem_limit(blocks1)),
    )(x_rows, wqkv, bqkv)

    # PyTorch's raw .view(B*H, -1, dim_head): a free row-major reshape done in
    # HBM between kernels (bug-compatible interleaved head split preserved).
    q3 = q_flat.reshape(G, L, dh)
    k3 = k_flat.reshape(G, L, dh)
    v3 = v_flat.reshape(G, L, dh)

    # ---------------- call 2: batched attention -----------------------------
    blocks2 = [4 * _nbytes((Gt, L, dh), f32)]
    ctx3 = pl.pallas_call(
        attention_kernel,
        grid=(G // Gt,),
        out_shape=jax.ShapeDtypeStruct((G, L, dh), f32),
        in_specs=[pl.BlockSpec((Gt, L, dh), lambda i: (i, 0, 0)) for _ in range(3)],
        out_specs=pl.BlockSpec((Gt, L, dh), lambda i: (i, 0, 0)),
        compiler_params=pltpu.CompilerParams(
            dimension_semantics=("parallel",),
            vmem_limit_bytes=_vmem_limit(blocks2)),
    )(q3, k3, v3)

    # context.view(B, -1, dim_head * num_head): free reshape back to token rows.
    ctx_rows = ctx3.reshape(R, D)

    # ------- call 3: out-proj + residual + LN + FFN + residual + LN ---------
    blocks3 = [2 * _nbytes((Rt, D), f32), _nbytes((D, D), bf16),
               _nbytes((D, hidden), bf16), _nbytes((hidden, D), bf16),
               6 * _nbytes((1, D), f32), _nbytes((1, hidden), f32),
               _nbytes((Rt, D), f32)]
    res = lambda shape: pl.BlockSpec(shape, lambda i: (0, 0))   # VMEM-resident
    out_rows = pl.pallas_call(
        out_ffn_kernel,
        grid=(R // Rt,),
        out_shape=jax.ShapeDtypeStruct((R, D), f32),
        in_specs=[
            pl.BlockSpec((Rt, D), lambda i: (i, 0)),     # attention context rows
            pl.BlockSpec((Rt, D), lambda i: (i, 0)),     # x rows (residual)
            res((D, D)), res((1, D)),                    # Wo, bo
            res((1, D)), res((1, D)),                    # LN1 gamma / beta
            res((D, hidden)), res((1, hidden)),          # W1, b1
            res((hidden, D)), res((1, D)),               # W2, b2
            res((1, D)), res((1, D)),                    # LN2 gamma / beta
        ],
        out_specs=pl.BlockSpec((Rt, D), lambda i: (i, 0)),
        compiler_params=pltpu.CompilerParams(
            dimension_semantics=("parallel",),
            vmem_limit_bytes=_vmem_limit(blocks3)),
    )(ctx_rows, x_rows, wo, params["bo"], params["g1"], params["be1"],
      w1, params["b1"], w2, params["b2"], params["g2"], params["be2"])

    return out_rows.reshape(B, L, D)


# ---------------------------------------------------------------------------
# Pure-JAX f32 reference (mirrors the PyTorch forward exactly)
# ---------------------------------------------------------------------------
def encoder_ref(x, params, num_head):
    B, L, D = x.shape
    dh = D // num_head

    def ln(y, g, b):
        mu = y.mean(-1, keepdims=True)
        var = ((y - mu) ** 2).mean(-1, keepdims=True)
        return (y - mu) / jnp.sqrt(var + EPS) * g + b

    Q = x @ params["wq"] + params["bq"][0]
    K = x @ params["wk"] + params["bk"][0]
    V = x @ params["wv"] + params["bv"][0]
    Q = Q.reshape(B * num_head, -1, dh)
    K = K.reshape(B * num_head, -1, dh)
    V = V.reshape(B * num_head, -1, dh)
    scale = dh ** -0.5
    att = jax.nn.softmax(jnp.einsum("bqd,bkd->bqk", Q, K) * scale, axis=-1)
    ctx = att @ V
    ctx = ctx.reshape(B, -1, dh * num_head)
    out = ctx @ params["wo"] + params["bo"][0]
    out = out + x
    out = ln(out, params["g1"][0], params["be1"][0])
    h = jax.nn.relu(out @ params["w1"] + params["b1"][0])
    ff = h @ params["w2"] + params["b2"][0]
    return ln(ff + out, params["g2"][0], params["be2"][0])


def init_params(key, dim_model, hidden):
    ks = jax.random.split(key, 10)
    norm = lambda k, shape: jax.random.normal(k, shape, jnp.float32) * 0.1
    D, Hd = dim_model, hidden
    return {
        "wq": norm(ks[0], (D, D)), "bq": norm(ks[1], (1, D)),
        "wk": norm(ks[2], (D, D)), "bk": norm(ks[3], (1, D)),
        "wv": norm(ks[4], (D, D)), "bv": norm(ks[5], (1, D)),
        "wo": norm(ks[6], (D, D)), "bo": norm(ks[7], (1, D)),
        "g1": jnp.ones((1, D), jnp.float32), "be1": jnp.zeros((1, D), jnp.float32),
        "w1": norm(ks[8], (D, Hd)), "b1": jnp.zeros((1, Hd), jnp.float32),
        "w2": norm(ks[9], (Hd, D)), "b2": jnp.zeros((1, D), jnp.float32),
        "g2": jnp.ones((1, D), jnp.float32), "be2": jnp.zeros((1, D), jnp.float32),
    }


if __name__ == "__main__":
    # Small shapes: batch=2, seq_len=8, dim_model=32, num_head=4, hidden=64
    B, L, D, NUM_HEAD, HIDDEN = 2, 8, 32, 4, 64

    key = jax.random.PRNGKey(0)
    kx, kp = jax.random.split(key)
    x = jax.random.normal(kx, (B, L, D), jnp.float32)
    params = init_params(kp, D, HIDDEN)

    fwd = jax.jit(functools.partial(encoder_forward, num_head=NUM_HEAD))
    out = jax.block_until_ready(fwd(x, params))
    ref = encoder_ref(x, params, NUM_HEAD)

    assert out.shape == (B, L, D)
    err = float(jnp.max(jnp.abs(out - ref)))
    # Kernel uses bf16 matmul operands (f32 accumulation); reference is pure
    # f32 -> compare with a bf16-appropriate tolerance.
    assert jnp.allclose(out, ref, rtol=3e-2, atol=3e-2), f"max abs err {err}"
    print("KERNEL_OK")
</pallas_src>

<mosaic_0001>
module attributes {stable_mosaic.version = 11 : i64} {
  func.func @qkv_proj_kernel(%arg0: i32, %arg1: memref<16x32xf32, #tpu.memory_space<vmem>>, %arg2: memref<32x96xbf16, #tpu.memory_space<vmem>>, %arg3: memref<1x96xf32, #tpu.memory_space<vmem>>, %arg4: memref<16x32xf32, #tpu.memory_space<vmem>>, %arg5: memref<16x32xf32, #tpu.memory_space<vmem>>, %arg6: memref<16x32xf32, #tpu.memory_space<vmem>>) attributes {dimension_semantics = [#tpu.dimension_semantics<parallel>], iteration_bounds = array<i64: 1>, scalar_prefetch = 0 : i64, scratch_operands = 0 : i64, tpu.core_type = #tpu.core_type<tc>, window_params = [{transform_indices = @transform_0, window_bounds = array<i64: 16, 32>}, {pipeline_mode = #tpu.pipeline_mode<synchronous>, transform_indices = @transform_1, window_bounds = array<i64: 32, 96>}, {pipeline_mode = #tpu.pipeline_mode<synchronous>, transform_indices = @transform_2, window_bounds = array<i64: 1, 96>}, {transform_indices = @transform_3, window_bounds = array<i64: 16, 32>}, {transform_indices = @transform_4, window_bounds = array<i64: 16, 32>}, {transform_indices = @transform_5, window_bounds = array<i64: 16, 32>}]} {
    %c0 = arith.constant 0 : index
    %c0_0 = arith.constant 0 : index
    %0 = vector.load %arg1[%c0, %c0_0] : memref<16x32xf32, #tpu.memory_space<vmem>>, vector<16x32xf32>
    %1 = arith.truncf %0 : vector<16x32xf32> to vector<16x32xbf16>
    %c0_1 = arith.constant 0 : index
    %c0_2 = arith.constant 0 : index
    %2 = vector.load %arg2[%c0_1, %c0_2] : memref<32x96xbf16, #tpu.memory_space<vmem>>, vector<32x96xbf16>
    %cst = arith.constant dense<0.000000e+00> : vector<16x96xf32>
    %3 = tpu.matmul %1, %2, %cst {dimension_numbers = #tpu.dot_dimension_numbers<[1], [0], [0], [1], [0, 0, 1, 1], [], []>} : vector<16x32xbf16>, vector<32x96xbf16>, vector<16x96xf32> -> vector<16x96xf32>
    %c0_3 = arith.constant 0 : index
    %c0_4 = arith.constant 0 : index
    %4 = vector.load %arg3[%c0_3, %c0_4] : memref<1x96xf32, #tpu.memory_space<vmem>>, vector<1x96xf32>
    %5 = vector.broadcast %4 : vector<1x96xf32> to vector<16x96xf32>
    %6 = arith.addf %3, %5 : vector<16x96xf32>
    %7 = vector.extract_strided_slice %6 {offsets = [0, 0], sizes = [16, 32], strides = [1, 1]} : vector<16x96xf32> to vector<16x32xf32>
    %c0_5 = arith.constant 0 : index
    %c0_6 = arith.constant 0 : index
    %8 = vector.load %arg4[%c0_5, %c0_6] : memref<16x32xf32, #tpu.memory_space<vmem>>, vector<16x32xf32>
    tpu.vector_store %arg4[%c0_5, %c0_6], %7 {strides = array<i32>} : memref<16x32xf32, #tpu.memory_space<vmem>>, vector<16x32xf32>,
    %9 = vector.extract_strided_slice %6 {offsets = [0, 32], sizes = [16, 32], strides = [1, 1]} : vector<16x96xf32> to vector<16x32xf32>
    %c0_7 = arith.constant 0 : index
    %c0_8 = arith.constant 0 : index
    %10 = vector.load %arg5[%c0_7, %c0_8] : memref<16x32xf32, #tpu.memory_space<vmem>>, vector<16x32xf32>
    tpu.vector_store %arg5[%c0_7, %c0_8], %9 {strides = array<i32>} : memref<16x32xf32, #tpu.memory_space<vmem>>, vector<16x32xf32>,
    %11 = vector.extract_strided_slice %6 {offsets = [0, 64], sizes = [16, 32], strides = [1, 1]} : vector<16x96xf32> to vector<16x32xf32>
    %c0_9 = arith.constant 0 : index
    %c0_10 = arith.constant 0 : index
    %12 = vector.load %arg6[%c0_9, %c0_10] : memref<16x32xf32, #tpu.memory_space<vmem>>, vector<16x32xf32>
    tpu.vector_store %arg6[%c0_9, %c0_10], %11 {strides = array<i32>} : memref<16x32xf32, #tpu.memory_space<vmem>>, vector<16x32xf32>,
    return
  }
  func.func @transform_0(%arg0: i32) -> (i32, i32) {
    %c0_i32 = arith.constant 0 : i32
    %c0_i32_0 = arith.constant 0 : i32
    return %arg0, %c0_i32 : i32, i32
  }
  func.func @transform_1(%arg0: i32) -> (i32, i32) {
    %c0_i32 = arith.constant 0 : i32
    %c0_i32_0 = arith.constant 0 : i32
    %c0_i32_1 = arith.constant 0 : i32
    return %c0_i32, %c0_i32_0 : i32, i32
  }
  func.func @transform_2(%arg0: i32) -> (i32, i32) {
    %c0_i32 = arith.constant 0 : i32
    %c0_i32_0 = arith.constant 0 : i32
    %c0_i32_1 = arith.constant 0 : i32
    return %c0_i32, %c0_i32_0 : i32, i32
  }
  func.func @transform_3(%arg0: i32) -> (i32, i32) {
    %c0_i32 = arith.constant 0 : i32
    %c0_i32_0 = arith.constant 0 : i32
    return %arg0, %c0_i32 : i32, i32
  }
  func.func @transform_4(%arg0: i32) -> (i32, i32) {
    %c0_i32 = arith.constant 0 : i32
    %c0_i32_0 = arith.constant 0 : i32
    return %arg0, %c0_i32 : i32, i32
  }
  func.func @transform_5(%arg0: i32) -> (i32, i32) {
    %c0_i32 = arith.constant 0 : i32
    %c0_i32_0 = arith.constant 0 : i32
    return %arg0, %c0_i32 : i32, i32
  }
}

module attributes {stable_mosaic.version = 11 : i64} {
  func.func @attention_kernel(%arg0: i32, %arg1: memref<8x8x8xf32, #tpu.memory_space<vmem>>, %arg2: memref<8x8x8xf32, #tpu.memory_space<vmem>>, %arg3: memref<8x8x8xf32, #tpu.memory_space<vmem>>, %arg4: memref<8x8x8xf32, #tpu.memory_space<vmem>>) attributes {dimension_semantics = [#tpu.dimension_semantics<parallel>], iteration_bounds = array<i64: 1>, scalar_prefetch = 0 : i64, scratch_operands = 0 : i64, tpu.core_type = #tpu.core_type<tc>, window_params = [{transform_indices = @transform_0, window_bounds = array<i64: 8, 8, 8>}, {transform_indices = @transform_1, window_bounds = array<i64: 8, 8, 8>}, {transform_indices = @transform_2, window_bounds = array<i64: 8, 8, 8>}, {transform_indices = @transform_3, window_bounds = array<i64: 8, 8, 8>}]} {
    %c0 = arith.constant 0 : index
    %c0_0 = arith.constant 0 : index
    %c0_1 = arith.constant 0 : index
    %0 = vector.load %arg1[%c0, %c0_0, %c0_1] : memref<8x8x8xf32, #tpu.memory_space<vmem>>, vector<8x8x8xf32>
    %1 = arith.truncf %0 : vector<8x8x8xf32> to vector<8x8x8xbf16>
    %c0_2 = arith.constant 0 : index
    %c0_3 = arith.constant 0 : index
    %c0_4 = arith.constant 0 : index
    %2 = vector.load %arg2[%c0_2, %c0_3, %c0_4] : memref<8x8x8xf32, #tpu.memory_space<vmem>>, vector<8x8x8xf32>
    %3 = arith.truncf %2 : vector<8x8x8xf32> to vector<8x8x8xbf16>
    %c0_5 = arith.constant 0 : index
    %c0_6 = arith.constant 0 : index
    %c0_7 = arith.constant 0 : index
    %4 = vector.load %arg3[%c0_5, %c0_6, %c0_7] : memref<8x8x8xf32, #tpu.memory_space<vmem>>, vector<8x8x8xf32>
    %5 = arith.truncf %4 : vector<8x8x8xf32> to vector<8x8x8xbf16>
    %cst = arith.constant dense<0.000000e+00> : vector<8x8x8xf32>
    %6 = tpu.matmul %1, %3, %cst {dimension_numbers = #tpu.dot_dimension_numbers<[2], [2], [1], [1], [0, 0, 0, 1, 1, 1], [0], [0]>} : vector<8x8x8xbf16>, vector<8x8x8xbf16>, vector<8x8x8xf32> -> vector<8x8x8xf32>
    %cst_8 = arith.constant dense<0xFF800000> : vector<8x8xf32>
    %7 = vector.multi_reduction <maximumf>, %6, %cst_8 [2] : vector<8x8x8xf32> to vector<8x8xf32>
    %8 = vector.shape_cast %7 : vector<8x8xf32> to vector<8x8x1xf32>
    %9 = vector.broadcast %8 : vector<8x8x1xf32> to vector<8x8x8xf32>
    %10 = arith.subf %6, %9 : vector<8x8x8xf32>
    %11 = math.exp %10 : vector<8x8x8xf32>
    %cst_9 = arith.constant dense<0.000000e+00> : vector<8x8xf32>
    %12 = vector.multi_reduction <add>, %11, %cst_9 [2] : vector<8x8x8xf32> to vector<8x8xf32>
    %13 = vector.shape_cast %12 : vector<8x8xf32> to vector<8x8x1xf32>
    %14 = vector.broadcast %13 : vector<8x8x1xf32> to vector<8x8x8xf32>
    %15 = arith.divf %11, %14 : vector<8x8x8xf32>
    %16 = arith.truncf %15 : vector<8x8x8xf32> to vector<8x8x8xbf16>
    %cst_10 = arith.constant dense<0.000000e+00> : vector<8x8x8xf32>
    %17 = tpu.matmul %16, %5, %cst_10 {dimension_numbers = #tpu.dot_dimension_numbers<[2], [1], [1], [2], [0, 0, 0, 1, 1, 2], [0], [0]>} : vector<8x8x8xbf16>, vector<8x8x8xbf16>, vector<8x8x8xf32> -> vector<8x8x8xf32>
    %c0_11 = arith.constant 0 : index
    %c0_12 = arith.constant 0 : index
    %c0_13 = arith.constant 0 : index
    %18 = vector.load %arg4[%c0_11, %c0_12, %c0_13] : memref<8x8x8xf32, #tpu.memory_space<vmem>>, vector<8x8x8xf32>
    tpu.vector_store %arg4[%c0_11, %c0_12, %c0_13], %17 {strides = array<i32>} : memref<8x8x8xf32, #tpu.memory_space<vmem>>, vector<8x8x8xf32>,
    return
  }
  func.func @transform_0(%arg0: i32) -> (i32, i32, i32) {
    %c0_i32 = arith.constant 0 : i32
    %c0_i32_0 = arith.constant 0 : i32
    %c0_i32_1 = arith.constant 0 : i32
    return %arg0, %c0_i32, %c0_i32_0 : i32, i32, i32
  }
  func.func @transform_1(%arg0: i32) -> (i32, i32, i32) {
    %c0_i32 = arith.constant 0 : i32
    %c0_i32_0 = arith.constant 0 : i32
    %c0_i32_1 = arith.constant 0 : i32
    return %arg0, %c0_i32, %c0_i32_0 : i32, i32, i32
  }
  func.func @transform_2(%arg0: i32) -> (i32, i32, i32) {
    %c0_i32 = arith.constant 0 : i32
    %c0_i32_0 = arith.constant 0 : i32
    %c0_i32_1 = arith.constant 0 : i32
    return %arg0, %c0_i32, %c0_i32_0 : i32, i32, i32
  }
  func.func @transform_3(%arg0: i32) -> (i32, i32, i32) {
    %c0_i32 = arith.constant 0 : i32
    %c0_i32_0 = arith.constant 0 : i32
    %c0_i32_1 = arith.constant 0 : i32
    return %arg0, %c0_i32, %c0_i32_0 : i32, i32, i32
  }
}

module attributes {stable_mosaic.version = 11 : i64} {
  func.func @out_ffn_kernel(%arg0: i32, %arg1: memref<16x32xf32, #tpu.memory_space<vmem>>, %arg2: memref<16x32xf32, #tpu.memory_space<vmem>>, %arg3: memref<32x32xbf16, #tpu.memory_space<vmem>>, %arg4: memref<1x32xf32, #tpu.memory_space<vmem>>, %arg5: memref<1x32xf32, #tpu.memory_space<vmem>>, %arg6: memref<1x32xf32, #tpu.memory_space<vmem>>, %arg7: memref<32x64xbf16, #tpu.memory_space<vmem>>, %arg8: memref<1x64xf32, #tpu.memory_space<vmem>>, %arg9: memref<64x32xbf16, #tpu.memory_space<vmem>>, %arg10: memref<1x32xf32, #tpu.memory_space<vmem>>, %arg11: memref<1x32xf32, #tpu.memory_space<vmem>>, %arg12: memref<1x32xf32, #tpu.memory_space<vmem>>, %arg13: memref<16x32xf32, #tpu.memory_space<vmem>>) attributes {dimension_semantics = [#tpu.dimension_semantics<parallel>], iteration_bounds = array<i64: 1>, scalar_prefetch = 0 : i64, scratch_operands = 0 : i64, tpu.core_type = #tpu.core_type<tc>, window_params = [{transform_indices = @transform_0, window_bounds = array<i64: 16, 32>}, {transform_indices = @transform_1, window_bounds = array<i64: 16, 32>}, {pipeline_mode = #tpu.pipeline_mode<synchronous>, transform_indices = @transform_2, window_bounds = array<i64: 32, 32>}, {pipeline_mode = #tpu.pipeline_mode<synchronous>, transform_indices = @transform_3, window_bounds = array<i64: 1, 32>}, {pipeline_mode = #tpu.pipeline_mode<synchronous>, transform_indices = @transform_4, window_bounds = array<i64: 1, 32>}, {pipeline_mode = #tpu.pipeline_mode<synchronous>, transform_indices = @transform_5, window_bounds = array<i64: 1, 32>}, {pipeline_mode = #tpu.pipeline_mode<synchronous>, transform_indices = @transform_6, window_bounds = array<i64: 32, 64>}, {pipeline_mode = #tpu.pipeline_mode<synchronous>, transform_indices = @transform_7, window_bounds = array<i64: 1, 64>}, {pipeline_mode = #tpu.pipeline_mode<synchronous>, transform_indices = @transform_8, window_bounds = array<i64: 64, 32>}, {pipeline_mode = #tpu.pipeline_mode<synchronous>, transform_indices = @transform_9, window_bounds = array<i64: 1, 32>}, {pipeline_mode = #tpu.pipeline_mode<synchronous>, transform_indices = @transform_10, window_bounds = array<i64: 1, 32>}, {pipeline_mode = #tpu.pipeline_mode<synchronous>, transform_indices = @transform_11, window_bounds = array<i64: 1, 32>}, {transform_indices = @transform_12, window_bounds = array<i64: 16, 32>}]} {
    %c0 = arith.constant 0 : index
    %c0_0 = arith.constant 0 : index
    %0 = vector.load %arg1[%c0, %c0_0] : memref<16x32xf32, #tpu.memory_space<vmem>>, vector<16x32xf32>
    %1 = arith.truncf %0 : vector<16x32xf32> to vector<16x32xbf16>
    %c0_1 = arith.constant 0 : index
    %c0_2 = arith.constant 0 : index
    %2 = vector.load %arg3[%c0_1, %c0_2] : memref<32x32xbf16, #tpu.memory_space<vmem>>, vector<32x32xbf16>
    %cst = arith.constant dense<0.000000e+00> : vector<16x32xf32>
    %3 = tpu.matmul %1, %2, %cst {dimension_numbers = #tpu.dot_dimension_numbers<[1], [0], [0], [1], [0, 0, 1, 1], [], []>} : vector<16x32xbf16>, vector<32x32xbf16>, vector<16x32xf32> -> vector<16x32xf32>
    %c0_3 = arith.constant 0 : index
    %c0_4 = arith.constant 0 : index
    %4 = vector.load %arg4[%c0_3, %c0_4] : memref<1x32xf32, #tpu.memory_space<vmem>>, vector<1x32xf32>
    %5 = vector.broadcast %4 : vector<1x32xf32> to vector<16x32xf32>
    %6 = arith.addf %3, %5 : vector<16x32xf32>
    %c0_5 = arith.constant 0 : index
    %c0_6 = arith.constant 0 : index
    %7 = vector.load %arg2[%c0_5, %c0_6] : memref<16x32xf32, #tpu.memory_space<vmem>>, vector<16x32xf32>
    %8 = arith.addf %6, %7 : vector<16x32xf32>
    %c0_7 = arith.constant 0 : index
    %c0_8 = arith.constant 0 : index
    %9 = vector.load %arg5[%c0_7, %c0_8] : memref<1x32xf32, #tpu.memory_space<vmem>>, vector<1x32xf32>
    %c0_9 = arith.constant 0 : index
    %c0_10 = arith.constant 0 : index
    %10 = vector.load %arg6[%c0_9, %c0_10] : memref<1x32xf32, #tpu.memory_space<vmem>>, vector<1x32xf32>
    %cst_11 = arith.constant dense<0.000000e+00> : vector<16xf32>
    %11 = vector.multi_reduction <add>, %8, %cst_11 [1] : vector<16x32xf32> to vector<16xf32>
    %12 = vector.shape_cast %11 : vector<16xf32> to vector<16x1xf32>
    %cst_12 = arith.constant 3.200000e+01 : f32
    %13 = vector.broadcast %cst_12 : f32 to vector<16x1xf32>
    %14 = arith.divf %12, %13 : vector<16x1xf32>
    %15 = arith.mulf %8, %8 : vector<16x32xf32>
    %cst_13 = arith.constant dense<0.000000e+00> : vector<16xf32>
    %16 = vector.multi_reduction <add>, %15, %cst_13 [1] : vector<16x32xf32> to vector<16xf32>
    %17 = vector.shape_cast %16 : vector<16xf32> to vector<16x1xf32>
    %cst_14 = arith.constant 3.200000e+01 : f32
    %18 = vector.broadcast %cst_14 : f32 to vector<16x1xf32>
    %19 = arith.divf %17, %18 : vector<16x1xf32>
    %20 = arith.mulf %14, %14 : vector<16x1xf32>
    %21 = arith.subf %19, %20 : vector<16x1xf32>
    %cst_15 = arith.constant 0.000000e+00 : f32
    %22 = vector.broadcast %cst_15 : f32 to vector<16x1xf32>
    %23 = arith.maximumf %21, %22 : vector<16x1xf32>
    %24 = vector.broadcast %14 : vector<16x1xf32> to vector<16x32xf32>
    %25 = arith.subf %8, %24 : vector<16x32xf32>
    %cst_16 = arith.constant 9.99999974E-6 : f32
    %26 = vector.broadcast %cst_16 : f32 to vector<16x1xf32>
    %27 = arith.addf %23, %26 : vector<16x1xf32>
    %28 = math.rsqrt %27 : vector<16x1xf32>
    %29 = vector.broadcast %28 : vector<16x1xf32> to vector<16x32xf32>
    %30 = arith.mulf %25, %29 : vector<16x32xf32>
    %31 = vector.broadcast %9 : vector<1x32xf32> to vector<16x32xf32>
    %32 = arith.mulf %30, %31 : vector<16x32xf32>
    %33 = vector.broadcast %10 : vector<1x32xf32> to vector<16x32xf32>
    %34 = arith.addf %32, %33 : vector<16x32xf32>
    %35 = arith.truncf %34 : vector<16x32xf32> to vector<16x32xbf16>
    %c0_17 = arith.constant 0 : index
    %c0_18 = arith.constant 0 : index
    %36 = vector.load %arg7[%c0_17, %c0_18] : memref<32x64xbf16, #tpu.memory_space<vmem>>, vector<32x64xbf16>
    %cst_19 = arith.constant dense<0.000000e+00> : vector<16x64xf32>
    %37 = tpu.matmul %35, %36, %cst_19 {dimension_numbers = #tpu.dot_dimension_numbers<[1], [0], [0], [1], [0, 0, 1, 1], [], []>} : vector<16x32xbf16>, vector<32x64xbf16>, vector<16x64xf32> -> vector<16x64xf32>
    %c0_20 = arith.constant 0 : index
    %c0_21 = arith.constant 0 : index
    %38 = vector.load %arg8[%c0_20, %c0_21] : memref<1x64xf32, #tpu.memory_space<vmem>>, vector<1x64xf32>
    %39 = vector.broadcast %38 : vector<1x64xf32> to vector<16x64xf32>
    %40 = arith.addf %37, %39 : vector<16x64xf32>
    %cst_22 = arith.constant 0.000000e+00 : f32
    %41 = vector.broadcast %cst_22 : f32 to vector<16x64xf32>
    %42 = arith.maximumf %40, %41 : vector<16x64xf32>
    %43 = arith.truncf %42 : vector<16x64xf32> to vector<16x64xbf16>
    %c0_23 = arith.constant 0 : index
    %c0_24 = arith.constant 0 : index
    %44 = vector.load %arg9[%c0_23, %c0_24] : memref<64x32xbf16, #tpu.memory_space<vmem>>, vector<64x32xbf16>
    %cst_25 = arith.constant dense<0.000000e+00> : vector<16x32xf32>
    %45 = tpu.matmul %43, %44, %cst_25 {dimension_numbers = #tpu.dot_dimension_numbers<[1], [0], [0], [1], [0, 0, 1, 1], [], []>} : vector<16x64xbf16>, vector<64x32xbf16>, vector<16x32xf32> -> vector<16x32xf32>
    %c0_26 = arith.constant 0 : index
    %c0_27 = arith.constant 0 : index
    %46 = vector.load %arg10[%c0_26, %c0_27] : memref<1x32xf32, #tpu.memory_space<vmem>>, vector<1x32xf32>
    %47 = vector.broadcast %46 : vector<1x32xf32> to vector<16x32xf32>
    %48 = arith.addf %45, %47 : vector<16x32xf32>
    %49 = arith.addf %48, %34 : vector<16x32xf32>
    %c0_28 = arith.constant 0 : index
    %c0_29 = arith.constant 0 : index
    %50 = vector.load %arg11[%c0_28, %c0_29] : memref<1x32xf32, #tpu.memory_space<vmem>>, vector<1x32xf32>
    %c0_30 = arith.constant 0 : index
    %c0_31 = arith.constant 0 : index
    %51 = vector.load %arg12[%c0_30, %c0_31] : memref<1x32xf32, #tpu.memory_space<vmem>>, vector<1x32xf32>
    %cst_32 = arith.constant dense<0.000000e+00> : vector<16xf32>
    %52 = vector.multi_reduction <add>, %49, %cst_32 [1] : vector<16x32xf32> to vector<16xf32>
    %53 = vector.shape_cast %52 : vector<16xf32> to vector<16x1xf32>
    %cst_33 = arith.constant 3.200000e+01 : f32
    %54 = vector.broadcast %cst_33 : f32 to vector<16x1xf32>
    %55 = arith.divf %53, %54 : vector<16x1xf32>
    %56 = arith.mulf %49, %49 : vector<16x32xf32>
    %cst_34 = arith.constant dense<0.000000e+00> : vector<16xf32>
    %57 = vector.multi_reduction <add>, %56, %cst_34 [1] : vector<16x32xf32> to vector<16xf32>
    %58 = vector.shape_cast %57 : vector<16xf32> to vector<16x1xf32>
    %cst_35 = arith.constant 3.200000e+01 : f32
    %59 = vector.broadcast %cst_35 : f32 to vector<16x1xf32>
    %60 = arith.divf %58, %59 : vector<16x1xf32>
    %61 = arith.mulf %55, %55 : vector<16x1xf32>
    %62 = arith.subf %60, %61 : vector<16x1xf32>
    %cst_36 = arith.constant 0.000000e+00 : f32
    %63 = vector.broadcast %cst_36 : f32 to vector<16x1xf32>
    %64 = arith.maximumf %62, %63 : vector<16x1xf32>
    %65 = vector.broadcast %55 : vector<16x1xf32> to vector<16x32xf32>
    %66 = arith.subf %49, %65 : vector<16x32xf32>
    %cst_37 = arith.constant 9.99999974E-6 : f32
    %67 = vector.broadcast %cst_37 : f32 to vector<16x1xf32>
    %68 = arith.addf %64, %67 : vector<16x1xf32>
    %69 = math.rsqrt %68 : vector<16x1xf32>
    %70 = vector.broadcast %69 : vector<16x1xf32> to vector<16x32xf32>
    %71 = arith.mulf %66, %70 : vector<16x32xf32>
    %72 = vector.broadcast %50 : vector<1x32xf32> to vector<16x32xf32>
    %73 = arith.mulf %71, %72 : vector<16x32xf32>
    %74 = vector.broadcast %51 : vector<1x32xf32> to vector<16x32xf32>
    %75 = arith.addf %73, %74 : vector<16x32xf32>
    %c0_38 = arith.constant 0 : index
    %c0_39 = arith.constant 0 : index
    %76 = vector.load %arg13[%c0_38, %c0_39] : memref<16x32xf32, #tpu.memory_space<vmem>>, vector<16x32xf32>
    tpu.vector_store %arg13[%c0_38, %c0_39], %75 {strides = array<i32>} : memref<16x32xf32, #tpu.memory_space<vmem>>, vector<16x32xf32>,
    return
  }
  func.func @transform_0(%arg0: i32) -> (i32, i32) {
    %c0_i32 = arith.constant 0 : i32
    %c0_i32_0 = arith.constant 0 : i32
    return %arg0, %c0_i32 : i32, i32
  }
  func.func @transform_1(%arg0: i32) -> (i32, i32) {
    %c0_i32 = arith.constant 0 : i32
    %c0_i32_0 = arith.constant 0 : i32
    return %arg0, %c0_i32 : i32, i32
  }
  func.func @transform_2(%arg0: i32) -> (i32, i32) {
    %c0_i32 = arith.constant 0 : i32
    %c0_i32_0 = arith.constant 0 : i32
    %c0_i32_1 = arith.constant 0 : i32
    return %c0_i32, %c0_i32_0 : i32, i32
  }
  func.func @transform_3(%arg0: i32) -> (i32, i32) {
    %c0_i32 = arith.constant 0 : i32
    %c0_i32_0 = arith.constant 0 : i32
    %c0_i32_1 = arith.constant 0 : i32
    return %c0_i32, %c0_i32_0 : i32, i32
  }
  func.func @transform_4(%arg0: i32) -> (i32, i32) {
    %c0_i32 = arith.constant 0 : i32
    %c0_i32_0 = arith.constant 0 : i32
    %c0_i32_1 = arith.constant 0 : i32
    return %c0_i32, %c0_i32_0 : i32, i32
  }
  func.func @transform_5(%arg0: i32) -> (i32, i32) {
    %c0_i32 = arith.constant 0 : i32
    %c0_i32_0 = arith.constant 0 : i32
    %c0_i32_1 = arith.constant 0 : i32
    return %c0_i32, %c0_i32_0 : i32, i32
  }
  func.func @transform_6(%arg0: i32) -> (i32, i32) {
    %c0_i32 = arith.constant 0 : i32
    %c0_i32_0 = arith.constant 0 : i32
    %c0_i32_1 = arith.constant 0 : i32
    return %c0_i32, %c0_i32_0 : i32, i32
  }
  func.func @transform_7(%arg0: i32) -> (i32, i32) {
    %c0_i32 = arith.constant 0 : i32
    %c0_i32_0 = arith.constant 0 : i32
    %c0_i32_1 = arith.constant 0 : i32
    return %c0_i32, %c0_i32_0 : i32, i32
  }
  func.func @transform_8(%arg0: i32) -> (i32, i32) {
    %c0_i32 = arith.constant 0 : i32
    %c0_i32_0 = arith.constant 0 : i32
    %c0_i32_1 = arith.constant 0 : i32
    return %c0_i32, %c0_i32_0 : i32, i32
  }
  func.func @transform_9(%arg0: i32) -> (i32, i32) {
    %c0_i32 = arith.constant 0 : i32
    %c0_i32_0 = arith.constant 0 : i32
    %c0_i32_1 = arith.constant 0 : i32
    return %c0_i32, %c0_i32_0 : i32, i32
  }
  func.func @transform_10(%arg0: i32) -> (i32, i32) {
    %c0_i32 = arith.constant 0 : i32
    %c0_i32_0 = arith.constant 0 : i32
    %c0_i32_1 = arith.constant 0 : i32
    return %c0_i32, %c0_i32_0 : i32, i32
  }
  func.func @transform_11(%arg0: i32) -> (i32, i32) {
    %c0_i32 = arith.constant 0 : i32
    %c0_i32_0 = arith.constant 0 : i32
    %c0_i32_1 = arith.constant 0 : i32
    return %c0_i32, %c0_i32_0 : i32, i32
  }
  func.func @transform_12(%arg0: i32) -> (i32, i32) {
    %c0_i32 = arith.constant 0 : i32
    %c0_i32_0 = arith.constant 0 : i32
    return %arg0, %c0_i32 : i32, i32
  }
}

</mosaic_0001>

<llo_original>
// kernel: encoder_forward.3
$region0: #{encoder_forward.3}
  #allocation0 [shape = 'u32[]', space=smem, size = 0x4, offset = 0x4, fixed_abs, tag = 'smem constant byte address 0x4 - core index']
  #allocation1 [shape = 'u32[144,128]{1,0:T(1,128)}', space=vmem, size = 0x12000, scoped, tag = 'internal scratch']
  %s0 = inlined_call_operand.vmem [shape: f32[16,32], index: 0, kind: input, shape index: {}]
  %s1 = inlined_call_operand.vmem [shape: bf16[32,96], index: 1, kind: input, shape index: {}]
  %s2 = inlined_call_operand.vmem [shape: f32[1,96], index: 2, kind: input, shape index: {}]
  %s3 = inlined_call_operand.vmem [shape: f32[16,32], index: 3, kind: output, shape index: {0}]
  %s4 = inlined_call_operand.vmem [shape: f32[16,32], index: 4, kind: output, shape index: {1}]
  %s5 = inlined_call_operand.vmem [shape: f32[16,32], index: 5, kind: output, shape index: {2}]
  %6 = xla_tuple %s3, %s4, %s5
  %s7 = sld [smem:[#allocation0]]
  $region38: #{encoder_forward.3} parent=0
    _
  %s9 = ssub.s32 1, %s7
  %s10 = scalar_select 0, %s9, %s7
  // Predicated region
  $region2: #{encoder_forward.3} parent=0 // pred_check
    _
  $region3: #{encoder_forward.3} parent=0 // pred_check_branch
    %12 = sbr.rel (0) target = $region5
  $region4: #{encoder_forward.3} parent=0 // pred_region
    _
  $region5: #{encoder_forward.3} parent=0 // pred_fallthru
    _
  // Predicated region
  $region6: #{encoder_forward.3} parent=0 // pred_check
    _
  $region7: #{encoder_forward.3} parent=0 // pred_check_branch
    %14 = sbr.rel (0) target = $region9
  $region8: #{encoder_forward.3} parent=0 // pred_region
    _
  $region9: #{encoder_forward.3} parent=0 // pred_fallthru
    _
  // Predicated region
  $region10: #{encoder_forward.3} parent=0 // pred_check
    _
  $region11: #{encoder_forward.3} parent=0 // pred_check_branch
    %16 = sbr.rel (0) target = $region13
  $region12: #{encoder_forward.3} parent=0 // pred_region
    _
  $region13: #{encoder_forward.3} parent=0 // pred_fallthru
    _
  %v18 = vld [vmem:[%s0] sm:$0xff]
  %v19 = vld [vmem:[%s0 + $0x8] sm:$0xff]
  %v20 = vpack.c.bf16 %v19, %v18
  %v21 = vld [vmem:[%s1] sm:$0xf]
  %v22 = vld [vmem:[%s1 + $0x4] sm:$0xf]
  %v23 = vld [vmem:[%s1 + $0x8] sm:$0xf]
  %v24 = vld [vmem:[%s1 + $0xc] sm:$0xf]
  %v25 = vld [vmem:[%s2] sm:$0x1]
  %v27 = vlaneseq
  %v28 = vshrl.u32 %v27, 7
  %v29 = vsub.s32 0, %v28
  %v30 = vrot.slane %v25, %v29
  %v36 = vunpack.c.l.b16 %v21
  %v37 = vunpack.c.l.b16 %v22
  %v38 = vunpack.c.l.b16 %v23
  %v39 = vunpack.c.l.b16 %v24
  %v40 = vpack.c.b16 %v37, %v36
  %v41 = vpack.c.b16 %v39, %v38
  %vm44 = vcmask 261120
  %v46 = vsel %vm44, %v20, 0
  %48 = vmatprep.subr.bf16.mxu0 0
  %49 = vmatpush1.bf16.msra.mxu0 0
  %50 = vmatprep.subr.bf16.mxu0 0
  %51 = vmatpush1.bf16.msra.mxu0 0
  %52 = vmatprep.subr.bf16.mxu0 0
  %53 = vmatpush1.bf16.msra.mxu0 0
  %54 = vmatprep.subr.bf16.mxu0 0
  %55 = vmatpush1.bf16.msra.mxu0 0
  %56 = vmatprep.subr.bf16.mxu0 0
  %57 = vmatpush1.bf16.msra.mxu0 0
  %58 = vmatprep.subr.bf16.mxu0 0
  %59 = vmatpush1.bf16.msra.mxu0 0
  %60 = vmatprep.subr.bf16.mxu0 0
  %61 = vmatpush1.bf16.msra.mxu0 %v41
  %62 = vmatprep.subr.bf16.mxu0 0
  %63 = vmatpush1.bf16.msra.mxu0 %v40
  %64 = vmatprep.subr.bf16.mxu0 0
  %65 = vmatpush2.bf16.msra.mxu0 0
  %66 = vmatprep.subr.bf16.mxu0 0
  %67 = vmatpush2.bf16.msra.mxu0 0
  %68 = vmatprep.subr.bf16.mxu0 0
  %69 = vmatpush2.bf16.msra.mxu0 0
  %70 = vmatprep.subr.bf16.mxu0 0
  %71 = vmatpush2.bf16.msra.mxu0 0
  %72 = vmatprep.subr.bf16.mxu0 0
  %73 = vmatpush2.bf16.msra.mxu0 0
  %74 = vmatprep.subr.bf16.mxu0 0
  %75 = vmatpush2.bf16.msra.mxu0 0
  %76 = vmatprep.subr.bf16.mxu0 0
  %77 = vmatpush2.bf16.msra.mxu0 0
  %78 = vmatprep.subr.bf16.mxu0 0
  %79 = vmatpush2.bf16.msra.mxu0 0
  %80 = vmatprep.mubr.bf16.mxu0 0
  %81 = vmatmul.mubr.bf16.gmra.mxu0 %v46
  %v82 = vpop.f32.mrf.mxu0
  %v83 = vadd.f32 %v30, %v82
  %v84 = vpop.f32.mrf.mxu0
  %v85 = vpop.f32.mrf.mxu0
  %v86 = vadd.f32 %v30, %v85
  %v87 = vpop.f32.mrf.mxu0
  %88 = vdwg.mxu0
  %89 = vst.msk [vmem:[%s3] sm:$0xff] %vm44, %v83
  %90 = vst.msk [vmem:[%s3 + $0x8] sm:$0xff] %vm44, %v86
  %93 = vrot.lane.b32.xlu0 %v83, 96
  %v94 = vpop.permute.xlu0 %93
  %95 = vrot.lane.b32.xlu0 %v86, 96
  %v96 = vpop.permute.xlu0 %95
  %99 = vst.msk [vmem:[%s4] sm:$0xff] %vm44, %v94
  %100 = vst.msk [vmem:[%s4 + $0x8] sm:$0xff] %vm44, %v96
  %101 = vrot.lane.b32.xlu0 %v83, 64
  %v102 = vpop.permute.xlu0 %101
  %103 = vrot.lane.b32.xlu0 %v86, 64
  %v104 = vpop.permute.xlu0 %103
  %107 = vst.msk [vmem:[%s5] sm:$0xff] %vm44, %v102
  %108 = vst.msk [vmem:[%s5 + $0x8] sm:$0xff] %vm44, %v104
  // Predicated region
  $region14: #{encoder_forward.3} parent=0 // pred_check
    _
  $region15: #{encoder_forward.3} parent=0 // pred_check_branch
    %110 = sbr.rel (0) target = $region17
  $region16: #{encoder_forward.3} parent=0 // pred_region
    _
  $region17: #{encoder_forward.3} parent=0 // pred_fallthru
    _
  // Predicated region
  $region18: #{encoder_forward.3} parent=0 // pred_check
    _
  $region19: #{encoder_forward.3} parent=0 // pred_check_branch
    %112 = sbr.rel (0) target = $region21
  $region20: #{encoder_forward.3} parent=0 // pred_region
    _
  $region21: #{encoder_forward.3} parent=0 // pred_fallthru
    _
  // Predicated region
  $region22: #{encoder_forward.3} parent=0 // pred_check
    _
  $region23: #{encoder_forward.3} parent=0 // pred_check_branch
    %114 = sbr.rel (0) target = $region25
  $region24: #{encoder_forward.3} parent=0 // pred_region
    _
  $region25: #{encoder_forward.3} parent=0 // pred_fallthru
    _
  // Predicated region
  $region26: #{encoder_forward.3} parent=0 // pred_check
    _
  $region27: #{encoder_forward.3} parent=0 // pred_check_branch
    %116 = sbr.rel (0) target = $region29
  $region28: #{encoder_forward.3} parent=0 // pred_region
    _
  $region29: #{encoder_forward.3} parent=0 // pred_fallthru
    _
  // Predicated region
  $region30: #{encoder_forward.3} parent=0 // pred_check
    _
  $region31: #{encoder_forward.3} parent=0 // pred_check_branch
    %118 = sbr.rel (0) target = $region33
  $region32: #{encoder_forward.3} parent=0 // pred_region
    _
  $region33: #{encoder_forward.3} parent=0 // pred_fallthru
    _
  // Predicated region
  $region34: #{encoder_forward.3} parent=0 // pred_check
    _
  $region35: #{encoder_forward.3} parent=0 // pred_check_branch
    %120 = sbr.rel (0) target = $region37
  $region36: #{encoder_forward.3} parent=0 // pred_region
    _
  $region37: #{encoder_forward.3} parent=0 // pred_fallthru
    _

// kernel: encoder_forward.5
$region0: #{encoder_forward.5}
  #allocation0 [shape = 'u32[]', space=smem, size = 0x4, offset = 0x4, fixed_abs, tag = 'smem constant byte address 0x4 - core index']
  #allocation1 [shape = 'u32[144,128]{1,0:T(1,128)}', space=vmem, size = 0x12000, scoped, tag = 'internal scratch']
  %s0 = inlined_call_operand.vmem [shape: f32[16,32], index: 0, kind: input, shape index: {}]
  %s1 = inlined_call_operand.vmem [shape: f32[16,32], index: 1, kind: input, shape index: {}]
  %s2 = inlined_call_operand.vmem [shape: bf16[32,32], index: 2, kind: input, shape index: {}]
  %s3 = inlined_call_operand.vmem [shape: f32[1,32], index: 3, kind: input, shape index: {}]
  %s4 = inlined_call_operand.vmem [shape: f32[1,32], index: 4, kind: input, shape index: {}]
  %s5 = inlined_call_operand.vmem [shape: f32[1,32], index: 5, kind: input, shape index: {}]
  %s6 = inlined_call_operand.vmem [shape: bf16[32,64], index: 6, kind: input, shape index: {}]
  %s7 = inlined_call_operand.vmem [shape: f32[1,64], index: 7, kind: input, shape index: {}]
  %s8 = inlined_call_operand.vmem [shape: bf16[64,32], index: 8, kind: input, shape index: {}]
  %s9 = inlined_call_operand.vmem [shape: f32[1,32], index: 9, kind: input, shape index: {}]
  %s10 = inlined_call_operand.vmem [shape: f32[1,32], index: 10, kind: input, shape index: {}]
  %s11 = inlined_call_operand.vmem [shape: f32[1,32], index: 11, kind: input, shape index: {}]
  %s12 = inlined_call_operand.hbm [shape: f32[16,32], index: 12, kind: output, shape index: {}]
  %s13 = sld [smem:[#allocation0]]
  $region58: #{encoder_forward.5} parent=0
    _
  %s15 = ssub.s32 1, %s13
  %s16 = scalar_select 0, %s15, %s13
  $region1: #{encoder_forward.5} parent=0
    #allocation2 [shape = 'u8[8192]{0}', space=vmem, size = 0x2000, scoped, tag = 'output window, operand 0, single buffered']
    #allocation3 [shape = 's32[1]{0}', space=sflag, size = 0x4, scoped, tag = 'scoped memory for encoder_forward.5']
    %17 = vsyncpa [#allocation3], 0
    // Predicated region
    $region2: #{encoder_forward.5} parent=1 // pred_check
      _
    $region3: #{encoder_forward.5} parent=1 // pred_check_branch
      %19 = sbr.rel (0) target = $region5
    $region4: #{encoder_forward.5} parent=1 // pred_region
      _
    $region5: #{encoder_forward.5} parent=1 // pred_fallthru
      _
    // Predicated region
    $region6: #{encoder_forward.5} parent=1 // pred_check
      _
    $region7: #{encoder_forward.5} parent=1 // pred_check_branch
      %21 = sbr.rel (0) target = $region9
    $region8: #{encoder_forward.5} parent=1 // pred_region
      _
    $region9: #{encoder_forward.5} parent=1 // pred_fallthru
      _
    // Predicated region
    $region10: #{encoder_forward.5} parent=1 // pred_check
      _
    $region11: #{encoder_forward.5} parent=1 // pred_check_branch
      %23 = sbr.rel (0) target = $region13
    $region12: #{encoder_forward.5} parent=1 // pred_region
      _
    $region13: #{encoder_forward.5} parent=1 // pred_fallthru
      _
    // Predicated region
    $region14: #{encoder_forward.5} parent=1 // pred_check
      _
    $region15: #{encoder_forward.5} parent=1 // pred_check_branch
      %25 = sbr.rel (0) target = $region17
    $region16: #{encoder_forward.5} parent=1 // pred_region
      _
    $region17: #{encoder_forward.5} parent=1 // pred_fallthru
      _
    // Predicated region
    $region18: #{encoder_forward.5} parent=1 // pred_check
      _
    $region19: #{encoder_forward.5} parent=1 // pred_check_branch
      %27 = sbr.rel (0) target = $region21
    $region20: #{encoder_forward.5} parent=1 // pred_region
      _
    $region21: #{encoder_forward.5} parent=1 // pred_fallthru
      _
    // Predicated region
    $region22: #{encoder_forward.5} parent=1 // pred_check
      _
    $region23: #{encoder_forward.5} parent=1 // pred_check_branch
      %29 = sbr.rel (0) target = $region25
    $region24: #{encoder_forward.5} parent=1 // pred_region
      _
    $region25: #{encoder_forward.5} parent=1 // pred_fallthru
      _
    // Predicated region
    $region26: #{encoder_forward.5} parent=1 // pred_check
      _
    $region27: #{encoder_forward.5} parent=1 // pred_check_branch
      %31 = sbr.rel (0) target = $region29
    $region28: #{encoder_forward.5} parent=1 // pred_region
      _
    $region29: #{encoder_forward.5} parent=1 // pred_fallthru
      _
    // Predicated region
    $region30: #{encoder_forward.5} parent=1 // pred_check
      _
    $region31: #{encoder_forward.5} parent=1 // pred_check_branch
      %33 = sbr.rel (0) target = $region33
    $region32: #{encoder_forward.5} parent=1 // pred_region
      _
    $region33: #{encoder_forward.5} parent=1 // pred_fallthru
      _
    // Predicated region
    $region34: #{encoder_forward.5} parent=1 // pred_check
      _
    $region35: #{encoder_forward.5} parent=1 // pred_check_branch
      %35 = sbr.rel (0) target = $region37
    $region36: #{encoder_forward.5} parent=1 // pred_region
      _
    $region37: #{encoder_forward.5} parent=1 // pred_fallthru
      _
    // Predicated region
    $region38: #{encoder_forward.5} parent=1 // pred_check
      _
    $region39: #{encoder_forward.5} parent=1 // pred_check_branch
      %37 = sbr.rel (0) target = $region41
    $region40: #{encoder_forward.5} parent=1 // pred_region
      _
    $region41: #{encoder_forward.5} parent=1 // pred_fallthru
      _
    // Predicated region
    $region42: #{encoder_forward.5} parent=1 // pred_check
      _
    $region43: #{encoder_forward.5} parent=1 // pred_check_branch
      %39 = sbr.rel (0) target = $region45
    $region44: #{encoder_forward.5} parent=1 // pred_region
      _
    $region45: #{encoder_forward.5} parent=1 // pred_fallthru
      _
    // Predicated region
    $region46: #{encoder_forward.5} parent=1 // pred_check
      _
    $region47: #{encoder_forward.5} parent=1 // pred_check_branch
      %41 = sbr.rel (0) target = $region49
    $region48: #{encoder_forward.5} parent=1 // pred_region
      _
    $region49: #{encoder_forward.5} parent=1 // pred_fallthru
      _
    %v43 = vld [vmem:[%s0] sm:$0xff]
    %v44 = vld [vmem:[%s0 + $0x8] sm:$0xff]
    %v45 = vpack.c.bf16 %v44, %v43
    %v46 = vld [vmem:[%s2] sm:$0xf]
    %v47 = vld [vmem:[%s2 + $0x4] sm:$0xf]
    %v48 = vld [vmem:[%s2 + $0x8] sm:$0xf]
    %v49 = vld [vmem:[%s2 + $0xc] sm:$0xf]
    %v50 = vld [vmem:[%s3] sm:$0x1]
    %v52 = vlaneseq
    %v53 = vshrl.u32 %v52, 7
    %v54 = vsub.s32 0, %v53
    %v55 = vrot.slane %v50, %v54
    %v61 = vunpack.c.l.b16 %v46
    %v62 = vunpack.c.l.b16 %v47
    %v63 = vunpack.c.l.b16 %v48
    %v64 = vunpack.c.l.b16 %v49
    %v65 = vpack.c.b16 %v62, %v61
    %v66 = vpack.c.b16 %v64, %v63
    %vm69 = vcmask 261120
    %v71 = vsel %vm69, %v45, 0
    %73 = vmatprep.subr.bf16.mxu0 0
    %74 = vmatpush1.bf16.msra.mxu0 0
    %75 = vmatprep.subr.bf16.mxu0 0
    %76 = vmatpush1.bf16.msra.mxu0 0
    %77 = vmatprep.subr.bf16.mxu0 0
    %78 = vmatpush1.bf16.msra.mxu0 0
    %79 = vmatprep.subr.bf16.mxu0 0
    %80 = vmatpush1.bf16.msra.mxu0 0
    %81 = vmatprep.subr.bf16.mxu0 0
    %82 = vmatpush1.bf16.msra.mxu0 0
    %83 = vmatprep.subr.bf16.mxu0 0
    %84 = vmatpush1.bf16.msra.mxu0 0
    %85 = vmatprep.subr.bf16.mxu0 0
    %86 = vmatpush1.bf16.msra.mxu0 %v66
    %87 = vmatprep.subr.bf16.mxu0 0
    %88 = vmatpush1.bf16.msra.mxu0 %v65
    %89 = vmatprep.subr.bf16.mxu0 0
    %90 = vmatpush2.bf16.msra.mxu0 0
    %91 = vmatprep.subr.bf16.mxu0 0
    %92 = vmatpush2.bf16.msra.mxu0 0
    %93 = vmatprep.subr.bf16.mxu0 0
    %94 = vmatpush2.bf16.msra.mxu0 0
    %95 = vmatprep.subr.bf16.mxu0 0
    %96 = vmatpush2.bf16.msra.mxu0 0
    %97 = vmatprep.subr.bf16.mxu0 0
    %98 = vmatpush2.bf16.msra.mxu0 0
    %99 = vmatprep.subr.bf16.mxu0 0
    %100 = vmatpush2.bf16.msra.mxu0 0
    %101 = vmatprep.subr.bf16.mxu0 0
    %102 = vmatpush2.bf16.msra.mxu0 0
    %103 = vmatprep.subr.bf16.mxu0 0
    %104 = vmatpush2.bf16.msra.mxu0 0
    %105 = vmatprep.mubr.bf16.mxu0 0
    %106 = vmatmul.mubr.bf16.gmra.mxu0 %v71
    %v107 = vpop.f32.mrf.mxu0
    %v108 = vadd.f32 %v55, %v107
    %v109 = vpop.f32.mrf.mxu0
    %v110 = vpop.f32.mrf.mxu0
    %v111 = vadd.f32 %v55, %v110
    %v112 = vpop.f32.mrf.mxu0
    %113 = vdwg.mxu0
    %v114 = vld [vmem:[%s1] sm:$0xff]
    %v115 = vld [vmem:[%s1 + $0x8] sm:$0xff]
    %v116 = vadd.f32 %v108, %v114
    %v117 = vadd.f32 %v111, %v115
    %v118 = vld [vmem:[%s4] sm:$0x1]
    %v119 = vld [vmem:[%s5] sm:$0x1]
    %v120 = vsel %vm69, %v116, 0.0
    %121 = vadd.xlane.f32.xlu0 %v120
    %v122 = vpop.xlane.xlu0 %121
    %v123 = vsel %vm69, %v117, 0.0
    %124 = vadd.xlane.f32.xlu0 %v123
    %v125 = vpop.xlane.xlu0 %124
    %v126 = vrcp.pop 32.0
    %v127 = vmul.f32 %v122, %v126
    %v128 = vmul.f32 %v125, %v126
    %v129 = vmul.f32 %v116, %v116
    %v130 = vmul.f32 %v117, %v117
    %v131 = vsel %vm69, %v129, 0.0
    %132 = vadd.xlane.f32.xlu0 %v131
    %v133 = vpop.xlane.xlu0 %132
    %v134 = vsel %vm69, %v130, 0.0
    %135 = vadd.xlane.f32.xlu0 %v134
    %v136 = vpop.xlane.xlu0 %135
    %v137 = vmul.f32 %v133, %v126
    %v138 = vmul.f32 %v136, %v126
    %v139 = vmul.f32 %v127, %v127
    %v140 = vmul.f32 %v128, %v128
    %v141 = vsub.f32 %v137, %v139
    %v142 = vsub.f32 %v138, %v140
    %v143 = vmax.f32 %v141, 0.0
    %v144 = vmax.f32 %v142, 0.0
    %v145 = vsub.f32 %v116, %v127
    %v146 = vsub.f32 %v117, %v128
    %v147 = vadd.f32 %v143, 1e-05
    %v148 = vadd.f32 %v144, 1e-05
    %v149 = vrsqrt.pop %v147
    %v150 = vrsqrt.pop %v148
    %v151 = vmul.f32 %v145, %v149
    %v152 = vmul.f32 %v146, %v150
    %v154 = vlaneseq
    %v155 = vshrl.u32 %v154, 7
    %v156 = vsub.s32 0, %v155
    %v157 = vrot.slane %v118, %v156
    %v159 = vmul.f32 %v151, %v157
    %v160 = vmul.f32 %v152, %v157
    %v162 = vlaneseq
    %v163 = vshrl.u32 %v162, 7
    %v164 = vsub.s32 0, %v163
    %v165 = vrot.slane %v119, %v164
    %v167 = vadd.f32 %v159, %v165
    %v168 = vadd.f32 %v160, %v165
    %v169 = vpack.c.bf16 %v168, %v167
    %v170 = vld [vmem:[%s6] sm:$0xf]
    %v171 = vld [vmem:[%s6 + $0x4] sm:$0xf]
    %v172 = vld [vmem:[%s6 + $0x8] sm:$0xf]
    %v173 = vld [vmem:[%s6 + $0xc] sm:$0xf]
    %v174 = vld [vmem:[%s7] sm:$0x1]
    %v176 = vlaneseq
    %v177 = vshrl.u32 %v176, 7
    %v178 = vsub.s32 0, %v177
    %v179 = vrot.slane %v174, %v178
    %v185 = vunpack.c.l.b16 %v170
    %v186 = vunpack.c.l.b16 %v171
    %v187 = vunpack.c.l.b16 %v172
    %v188 = vunpack.c.l.b16 %v173
    %v189 = vpack.c.b16 %v186, %v185
    %v190 = vpack.c.b16 %v188, %v187
    %v194 = vsel %vm69, %v169, 0
    %196 = vmatprep.subr.bf16.mxu0 0
    %197 = vmatpush1.bf16.msra.mxu0 0
    %198 = vmatprep.subr.bf16.mxu0 0
    %199 = vmatpush1.bf16.msra.mxu0 0
    %200 = vmatprep.subr.bf16.mxu0 0
    %201 = vmatpush1.bf16.msra.mxu0 0
    %202 = vmatprep.subr.bf16.mxu0 0
    %203 = vmatpush1.bf16.msra.mxu0 0
    %204 = vmatprep.subr.bf16.mxu0 0
    %205 = vmatpush1.bf16.msra.mxu0 0
    %206 = vmatprep.subr.bf16.mxu0 0
    %207 = vmatpush1.bf16.msra.mxu0 0
    %208 = vmatprep.subr.bf16.mxu0 0
    %209 = vmatpush1.bf16.msra.mxu0 %v190
    %210 = vmatprep.subr.bf16.mxu0 0
    %211 = vmatpush1.bf16.msra.mxu0 %v189
    %212 = vmatprep.subr.bf16.mxu0 0
    %213 = vmatpush2.bf16.msra.mxu0 0
    %214 = vmatprep.subr.bf16.mxu0 0
    %215 = vmatpush2.bf16.msra.mxu0 0
    %216 = vmatprep.subr.bf16.mxu0 0
    %217 = vmatpush2.bf16.msra.mxu0 0
    %218 = vmatprep.subr.bf16.mxu0 0
    %219 = vmatpush2.bf16.msra.mxu0 0
    %220 = vmatprep.subr.bf16.mxu0 0
    %221 = vmatpush2.bf16.msra.mxu0 0
    %222 = vmatprep.subr.bf16.mxu0 0
    %223 = vmatpush2.bf16.msra.mxu0 0
    %224 = vmatprep.subr.bf16.mxu0 0
    %225 = vmatpush2.bf16.msra.mxu0 0
    %226 = vmatprep.subr.bf16.mxu0 0
    %227 = vmatpush2.bf16.msra.mxu0 0
    %228 = vmatprep.mubr.bf16.mxu0 0
    %229 = vmatmul.mubr.bf16.gmra.mxu0 %v194
    %v230 = vpop.f32.mrf.mxu0
    %v231 = vadd.f32 %v179, %v230
    %v232 = vpop.f32.mrf.mxu0
    %v233 = vpop.f32.mrf.mxu0
    %v234 = vadd.f32 %v179, %v233
    %v235 = vpop.f32.mrf.mxu0
    %236 = vdwg.mxu0
    %v237 = vmax.f32 %v231, 0.0
    %v238 = vmax.f32 %v234, 0.0
    %v239 = vpack.c.bf16 %v238, %v237
    %v240 = vld [vmem:[%s8] sm:$0xf]
    %v241 = vld [vmem:[%s8 + $0x4] sm:$0xf]
    %v242 = vld [vmem:[%s8 + $0x8] sm:$0xf]
    %v243 = vld [vmem:[%s8 + $0xc] sm:$0xf]
    %v244 = vld [vmem:[%s8 + $0x10] sm:$0xf]
    %v245 = vld [vmem:[%s8 + $0x14] sm:$0xf]
    %v246 = vld [vmem:[%s8 + $0x18] sm:$0xf]
    %v247 = vld [vmem:[%s8 + $0x1c] sm:$0xf]
    %v248 = vld [vmem:[%s9] sm:$0x1]
    %v250 = vlaneseq
    %v251 = vshrl.u32 %v250, 7
    %v252 = vsub.s32 0, %v251
    %v253 = vrot.slane %v248, %v252
    %v263 = vunpack.c.l.b16 %v240
    %v264 = vunpack.c.l.b16 %v241
    %v265 = vunpack.c.l.b16 %v242
    %v266 = vunpack.c.l.b16 %v243
    %v267 = vunpack.c.l.b16 %v244
    %v268 = vunpack.c.l.b16 %v245
    %v269 = vunpack.c.l.b16 %v246
    %v270 = vunpack.c.l.b16 %v247
    %v271 = vpack.c.b16 %v264, %v263
    %v272 = vpack.c.b16 %v266, %v265
    %v273 = vpack.c.b16 %v268, %v267
    %v274 = vpack.c.b16 %v270, %v269
    %vm279 = vcmask 523264
    %v281 = vsel %vm279, %v239, 0
    %283 = vmatprep.subr.bf16.mxu0 0
    %284 = vmatpush1.bf16.msra.mxu0 0
    %285 = vmatprep.subr.bf16.mxu0 0
    %286 = vmatpush1.bf16.msra.mxu0 0
    %287 = vmatprep.subr.bf16.mxu0 0
    %288 = vmatpush1.bf16.msra.mxu0 0
    %289 = vmatprep.subr.bf16.mxu0 0
    %290 = vmatpush1.bf16.msra.mxu0 0
    %291 = vmatprep.subr.bf16.mxu0 0
    %292 = vmatpush1.bf16.msra.mxu0 %v274
    %293 = vmatprep.subr.bf16.mxu0 0
    %294 = vmatpush1.bf16.msra.mxu0 %v273
    %295 = vmatprep.subr.bf16.mxu0 0
    %296 = vmatpush1.bf16.msra.mxu0 %v272
    %297 = vmatprep.subr.bf16.mxu0 0
    %298 = vmatpush1.bf16.msra.mxu0 %v271
    %299 = vmatprep.subr.bf16.mxu0 0
    %300 = vmatpush2.bf16.msra.mxu0 0
    %301 = vmatprep.subr.bf16.mxu0 0
    %302 = vmatpush2.bf16.msra.mxu0 0
    %303 = vmatprep.subr.bf16.mxu0 0
    %304 = vmatpush2.bf16.msra.mxu0 0
    %305 = vmatprep.subr.bf16.mxu0 0
    %306 = vmatpush2.bf16.msra.mxu0 0
    %307 = vmatprep.subr.bf16.mxu0 0
    %308 = vmatpush2.bf16.msra.mxu0 0
    %309 = vmatprep.subr.bf16.mxu0 0
    %310 = vmatpush2.bf16.msra.mxu0 0
    %311 = vmatprep.subr.bf16.mxu0 0
    %312 = vmatpush2.bf16.msra.mxu0 0
    %313 = vmatprep.subr.bf16.mxu0 0
    %314 = vmatpush2.bf16.msra.mxu0 0
    %315 = vmatprep.mubr.bf16.mxu0 0
    %316 = vmatmul.mubr.bf16.gmra.mxu0 %v281
    %v317 = vpop.f32.mrf.mxu0
    %v318 = vadd.f32 %v253, %v317
    %v319 = vpop.f32.mrf.mxu0
    %v320 = vpop.f32.mrf.mxu0
    %v321 = vadd.f32 %v253, %v320
    %v322 = vpop.f32.mrf.mxu0
    %323 = vdwg.mxu0
    %v324 = vadd.f32 %v318, %v167
    %v325 = vadd.f32 %v321, %v168
    %v326 = vld [vmem:[%s10] sm:$0x1]
    %v327 = vld [vmem:[%s11] sm:$0x1]
    %v328 = vsel %vm69, %v324, 0.0
    %329 = vadd.xlane.f32.xlu0 %v328
    %v330 = vpop.xlane.xlu0 %329
    %v331 = vsel %vm69, %v325, 0.0
    %332 = vadd.xlane.f32.xlu0 %v331
    %v333 = vpop.xlane.xlu0 %332
    %v334 = vmul.f32 %v330, %v126
    %v335 = vmul.f32 %v333, %v126
    %v336 = vmul.f32 %v324, %v324
    %v337 = vmul.f32 %v325, %v325
    %v338 = vsel %vm69, %v336, 0.0
    %339 = vadd.xlane.f32.xlu0 %v338
    %v340 = vpop.xlane.xlu0 %339
    %v341 = vsel %vm69, %v337, 0.0
    %342 = vadd.xlane.f32.xlu0 %v341
    %v343 = vpop.xlane.xlu0 %342
    %v344 = vmul.f32 %v340, %v126
    %v345 = vmul.f32 %v343, %v126
    %v346 = vmul.f32 %v334, %v334
    %v347 = vmul.f32 %v335, %v335
    %v348 = vsub.f32 %v344, %v346
    %v349 = vsub.f32 %v345, %v347
    %v350 = vmax.f32 %v348, 0.0
    %v351 = vmax.f32 %v349, 0.0
    %v352 = vsub.f32 %v324, %v334
    %v353 = vsub.f32 %v325, %v335
    %v354 = vadd.f32 %v350, 1e-05
    %v355 = vadd.f32 %v351, 1e-05
    %v356 = vrsqrt.pop %v354
    %v357 = vrsqrt.pop %v355
    %v358 = vmul.f32 %v352, %v356
    %v359 = vmul.f32 %v353, %v357
    %v361 = vlaneseq
    %v362 = vshrl.u32 %v361, 7
    %v363 = vsub.s32 0, %v362
    %v364 = vrot.slane %v326, %v363
    %v366 = vmul.f32 %v358, %v364
    %v367 = vmul.f32 %v359, %v364
    %v369 = vlaneseq
    %v370 = vshrl.u32 %v369, 7
    %v371 = vsub.s32 0, %v370
    %v372 = vrot.slane %v327, %v371
    %v374 = vadd.f32 %v366, %v372
    %v375 = vadd.f32 %v367, %v372
    %376 = vst.msk [vmem:[#allocation2] sm:$0xff] %vm69, %v374
    %377 = vst.msk [vmem:[#allocation2 + $0x8] sm:$0xff] %vm69, %v375
    // Predicated region
    $region50: #{encoder_forward.5} parent=1 // pred_check
      _
    $region51: #{encoder_forward.5} parent=1 // pred_check_branch
      %379 = sbr.rel (0) target = $region53
    $region52: #{encoder_forward.5} parent=1 // pred_region
      %s381 = ssub.s32 256, 256
      %382 = vsyncadd [#allocation3], %s381
      %s383 = sshll.u32 [#allocation2], 4
      %s384 = int_to_ptr.vmem [resolvable:$true] %s383
      %389 = dma.vmem_to_hbm [thread:$0]  %s384, 256, %s12, [#allocation3], 128, 128, 8
    $region53: #{encoder_forward.5} parent=1 // pred_fallthru
      _
    // Predicated region
    $region54: #{encoder_forward.5} parent=1 // pred_check
      _
    $region55: #{encoder_forward.5} parent=1 // pred_check_branch
      %391 = sbr.rel (0) target = $region57
    $region56: #{encoder_forward.5} parent=1 // pred_region
      %392 = dma.done [#allocation3], 256
    $region57: #{encoder_forward.5} parent=1 // pred_fallthru
      _
    %393 = vsyncpa [#allocation3], 1

// kernel: encoder_forward.4
$region0: #{encoder_forward.4}
  #allocation0 [shape = 'u32[]', space=smem, size = 0x4, offset = 0x4, fixed_abs, tag = 'smem constant byte address 0x4 - core index']
  #allocation1 [shape = 'u32[144,128]{1,0:T(1,128)}', space=vmem, size = 0x12000, scoped, tag = 'internal scratch']
  %s0 = inlined_call_operand.vmem [shape: f32[8,8,8], index: 0, kind: input, shape index: {}]
  %s1 = inlined_call_operand.vmem [shape: f32[8,8,8], index: 1, kind: input, shape index: {}]
  %s2 = inlined_call_operand.vmem [shape: f32[8,8,8], index: 2, kind: input, shape index: {}]
  %s3 = inlined_call_operand.vmem [shape: f32[8,8,8], index: 3, kind: output, shape index: {}]
  %s4 = sld [smem:[#allocation0]]
  $region22: #{encoder_forward.4} parent=0
    _
  %s6 = ssub.s32 1, %s4
  %s7 = scalar_select 0, %s6, %s4
  // Predicated region
  $region2: #{encoder_forward.4} parent=0 // pred_check
    _
  $region3: #{encoder_forward.4} parent=0 // pred_check_branch
    %9 = sbr.rel (0) target = $region5
  $region4: #{encoder_forward.4} parent=0 // pred_region
    _
  $region5: #{encoder_forward.4} parent=0 // pred_fallthru
    _
  // Predicated region
  $region6: #{encoder_forward.4} parent=0 // pred_check
    _
  $region7: #{encoder_forward.4} parent=0 // pred_check_branch
    %11 = sbr.rel (0) target = $region9
  $region8: #{encoder_forward.4} parent=0 // pred_region
    _
  $region9: #{encoder_forward.4} parent=0 // pred_fallthru
    _
  // Predicated region
  $region10: #{encoder_forward.4} parent=0 // pred_check
    _
  $region11: #{encoder_forward.4} parent=0 // pred_check_branch
    %13 = sbr.rel (0) target = $region13
  $region12: #{encoder_forward.4} parent=0 // pred_region
    _
  $region13: #{encoder_forward.4} parent=0 // pred_fallthru
    _
  %v15 = vld [vmem:[%s0] sm:$0xff]
  %v16 = vld [vmem:[%s0 + $0x8] sm:$0xff]
  %v17 = vld [vmem:[%s0 + $0x10] sm:$0xff]
  %v18 = vld [vmem:[%s0 + $0x18] sm:$0xff]
  %v19 = vld [vmem:[%s0 + $0x20] sm:$0xff]
  %v20 = vld [vmem:[%s0 + $0x28] sm:$0xff]
  %v21 = vld [vmem:[%s0 + $0x30] sm:$0xff]
  %v22 = vld [vmem:[%s0 + $0x38] sm:$0xff]
  %v23 = vpack.c.bf16 %v15, %v15
  %v24 = vpack.c.bf16 %v16, %v16
  %v25 = vpack.c.bf16 %v17, %v17
  %v26 = vpack.c.bf16 %v18, %v18
  %v27 = vpack.c.bf16 %v19, %v19
  %v28 = vpack.c.bf16 %v20, %v20
  %v29 = vpack.c.bf16 %v21, %v21
  %v30 = vpack.c.bf16 %v22, %v22
  %v31 = vld [vmem:[%s1] sm:$0xff]
  %v32 = vld [vmem:[%s1 + $0x8] sm:$0xff]
  %v33 = vld [vmem:[%s1 + $0x10] sm:$0xff]
  %v34 = vld [vmem:[%s1 + $0x18] sm:$0xff]
  %v35 = vld [vmem:[%s1 + $0x20] sm:$0xff]
  %v36 = vld [vmem:[%s1 + $0x28] sm:$0xff]
  %v37 = vld [vmem:[%s1 + $0x30] sm:$0xff]
  %v38 = vld [vmem:[%s1 + $0x38] sm:$0xff]
  %v39 = vpack.c.bf16 %v31, %v31
  %v40 = vpack.c.bf16 %v32, %v32
  %v41 = vpack.c.bf16 %v33, %v33
  %v42 = vpack.c.bf16 %v34, %v34
  %v43 = vpack.c.bf16 %v35, %v35
  %v44 = vpack.c.bf16 %v36, %v36
  %v45 = vpack.c.bf16 %v37, %v37
  %v46 = vpack.c.bf16 %v38, %v38
  %v47 = vld [vmem:[%s2] sm:$0xff]
  %v48 = vld [vmem:[%s2 + $0x8] sm:$0xff]
  %v49 = vld [vmem:[%s2 + $0x10] sm:$0xff]
  %v50 = vld [vmem:[%s2 + $0x18] sm:$0xff]
  %v51 = vld [vmem:[%s2 + $0x20] sm:$0xff]
  %v52 = vld [vmem:[%s2 + $0x28] sm:$0xff]
  %v53 = vld [vmem:[%s2 + $0x30] sm:$0xff]
  %v54 = vld [vmem:[%s2 + $0x38] sm:$0xff]
  %v55 = vpack.c.bf16 %v47, %v47
  %v56 = vpack.c.bf16 %v48, %v48
  %v57 = vpack.c.bf16 %v49, %v49
  %v58 = vpack.c.bf16 %v50, %v50
  %v59 = vpack.c.bf16 %v51, %v51
  %v60 = vpack.c.bf16 %v52, %v52
  %v61 = vpack.c.bf16 %v53, %v53
  %v62 = vpack.c.bf16 %v54, %v54
  %vm63 = vcmask 64512
  %v65 = vsel %vm63, %v23, 0
  %v68 = vsel %vm63, %v39, 0
  %70 = vmatprep.subr.bf16.mxu0 0
  %71 = vmatpush1.bf16.xpose.msra.mxu0 0
  %72 = vmatprep.subr.bf16.mxu0 0
  %73 = vmatpush1.bf16.xpose.msra.mxu0 0
  %74 = vmatprep.subr.bf16.mxu0 0
  %75 = vmatpush1.bf16.xpose.msra.mxu0 0
  %76 = vmatprep.subr.bf16.mxu0 0
  %77 = vmatpush1.bf16.xpose.msra.mxu0 0
  %78 = vmatprep.subr.bf16.mxu0 0
  %79 = vmatpush1.bf16.xpose.msra.mxu0 0
  %80 = vmatprep.subr.bf16.mxu0 0
  %81 = vmatpush1.bf16.xpose.msra.mxu0 0
  %82 = vmatprep.subr.bf16.mxu0 0
  %83 = vmatpush1.bf16.xpose.msra.mxu0 0
  %84 = vmatprep.subr.bf16.mxu0 0
  %85 = vmatpush1.bf16.xpose.msra.mxu0 %v68
  %86 = vmatprep.subr.bf16.mxu0 0
  %87 = vmatpush2.bf16.xpose.msra.mxu0 0
  %88 = vmatprep.subr.bf16.mxu0 0
  %89 = vmatpush2.bf16.xpose.msra.mxu0 0
  %90 = vmatprep.subr.bf16.mxu0 0
  %91 = vmatpush2.bf16.xpose.msra.mxu0 0
  %92 = vmatprep.subr.bf16.mxu0 0
  %93 = vmatpush2.bf16.xpose.msra.mxu0 0
  %94 = vmatprep.subr.bf16.mxu0 0
  %95 = vmatpush2.bf16.xpose.msra.mxu0 0
  %96 = vmatprep.subr.bf16.mxu0 0
  %97 = vmatpush2.bf16.xpose.msra.mxu0 0
  %98 = vmatprep.subr.bf16.mxu0 0
  %99 = vmatpush2.bf16.xpose.msra.mxu0 0
  %100 = vmatprep.subr.bf16.mxu0 0
  %101 = vmatpush2.bf16.xpose.msra.mxu0 0
  %102 = vmatprep.mubr.bf16.mxu0 0
  %103 = vmatmul.mubr.bf16.gmra.mxu0 %v65
  %v104 = vpop.f32.mrf.mxu0
  %v105 = vadd.f32 0.0, %v104
  %v106 = vpop.f32.mrf.mxu0
  %v107 = vpop.f32.mrf.mxu0
  %v108 = vpop.f32.mrf.mxu0
  %109 = vdwg.mxu0
  %v111 = vsel %vm63, %v24, 0
  %v114 = vsel %vm63, %v40, 0
  %116 = vmatprep.subr.bf16.mxu0 0
  %117 = vmatpush1.bf16.xpose.msra.mxu0 0
  %118 = vmatprep.subr.bf16.mxu0 0
  %119 = vmatpush1.bf16.xpose.msra.mxu0 0
  %120 = vmatprep.subr.bf16.mxu0 0
  %121 = vmatpush1.bf16.xpose.msra.mxu0 0
  %122 = vmatprep.subr.bf16.mxu0 0
  %123 = vmatpush1.bf16.xpose.msra.mxu0 0
  %124 = vmatprep.subr.bf16.mxu0 0
  %125 = vmatpush1.bf16.xpose.msra.mxu0 0
  %126 = vmatprep.subr.bf16.mxu0 0
  %127 = vmatpush1.bf16.xpose.msra.mxu0 0
  %128 = vmatprep.subr.bf16.mxu0 0
  %129 = vmatpush1.bf16.xpose.msra.mxu0 0
  %130 = vmatprep.subr.bf16.mxu0 0
  %131 = vmatpush1.bf16.xpose.msra.mxu0 %v114
  %132 = vmatprep.subr.bf16.mxu0 0
  %133 = vmatpush2.bf16.xpose.msra.mxu0 0
  %134 = vmatprep.subr.bf16.mxu0 0
  %135 = vmatpush2.bf16.xpose.msra.mxu0 0
  %136 = vmatprep.subr.bf16.mxu0 0
  %137 = vmatpush2.bf16.xpose.msra.mxu0 0
  %138 = vmatprep.subr.bf16.mxu0 0
  %139 = vmatpush2.bf16.xpose.msra.mxu0 0
  %140 = vmatprep.subr.bf16.mxu0 0
  %141 = vmatpush2.bf16.xpose.msra.mxu0 0
  %142 = vmatprep.subr.bf16.mxu0 0
  %143 = vmatpush2.bf16.xpose.msra.mxu0 0
  %144 = vmatprep.subr.bf16.mxu0 0
  %145 = vmatpush2.bf16.xpose.msra.mxu0 0
  %146 = vmatprep.subr.bf16.mxu0 0
  %147 = vmatpush2.bf16.xpose.msra.mxu0 0
  %148 = vmatprep.mubr.bf16.mxu0 0
  %149 = vmatmul.mubr.bf16.gmra.mxu0 %v111
  %v150 = vpop.f32.mrf.mxu0
  %v151 = vadd.f32 0.0, %v150
  %v152 = vpop.f32.mrf.mxu0
  %v153 = vpop.f32.mrf.mxu0
  %v154 = vpop.f32.mrf.mxu0
  %155 = vdwg.mxu0
  %v157 = vsel %vm63, %v25, 0
  %v160 = vsel %vm63, %v41, 0
  %162 = vmatprep.subr.bf16.mxu0 0
  %163 = vmatpush1.bf16.xpose.msra.mxu0 0
  %164 = vmatprep.subr.bf16.mxu0 0
  %165 = vmatpush1.bf16.xpose.msra.mxu0 0
  %166 = vmatprep.subr.bf16.mxu0 0
  %167 = vmatpush1.bf16.xpose.msra.mxu0 0
  %168 = vmatprep.subr.bf16.mxu0 0
  %169 = vmatpush1.bf16.xpose.msra.mxu0 0
  %170 = vmatprep.subr.bf16.mxu0 0
  %171 = vmatpush1.bf16.xpose.msra.mxu0 0
  %172 = vmatprep.subr.bf16.mxu0 0
  %173 = vmatpush1.bf16.xpose.msra.mxu0 0
  %174 = vmatprep.subr.bf16.mxu0 0
  %175 = vmatpush1.bf16.xpose.msra.mxu0 0
  %176 = vmatprep.subr.bf16.mxu0 0
  %177 = vmatpush1.bf16.xpose.msra.mxu0 %v160
  %178 = vmatprep.subr.bf16.mxu0 0
  %179 = vmatpush2.bf16.xpose.msra.mxu0 0
  %180 = vmatprep.subr.bf16.mxu0 0
  %181 = vmatpush2.bf16.xpose.msra.mxu0 0
  %182 = vmatprep.subr.bf16.mxu0 0
  %183 = vmatpush2.bf16.xpose.msra.mxu0 0
  %184 = vmatprep.subr.bf16.mxu0 0
  %185 = vmatpush2.bf16.xpose.msra.mxu0 0
  %186 = vmatprep.subr.bf16.mxu0 0
  %187 = vmatpush2.bf16.xpose.msra.mxu0 0
  %188 = vmatprep.subr.bf16.mxu0 0
  %189 = vmatpush2.bf16.xpose.msra.mxu0 0
  %190 = vmatprep.subr.bf16.mxu0 0
  %191 = vmatpush2.bf16.xpose.msra.mxu0 0
  %192 = vmatprep.subr.bf16.mxu0 0
  %193 = vmatpush2.bf16.xpose.msra.mxu0 0
  %194 = vmatprep.mubr.bf16.mxu0 0
  %195 = vmatmul.mubr.bf16.gmra.mxu0 %v157
  %v196 = vpop.f32.mrf.mxu0
  %v197 = vadd.f32 0.0, %v196
  %v198 = vpop.f32.mrf.mxu0
  %v199 = vpop.f32.mrf.mxu0
  %v200 = vpop.f32.mrf.mxu0
  %201 = vdwg.mxu0
  %v203 = vsel %vm63, %v26, 0
  %v206 = vsel %vm63, %v42, 0
  %208 = vmatprep.subr.bf16.mxu0 0
  %209 = vmatpush1.bf16.xpose.msra.mxu0 0
  %210 = vmatprep.subr.bf16.mxu0 0
  %211 = vmatpush1.bf16.xpose.msra.mxu0 0
  %212 = vmatprep.subr.bf16.mxu0 0
  %213 = vmatpush1.bf16.xpose.msra.mxu0 0
  %214 = vmatprep.subr.bf16.mxu0 0
  %215 = vmatpush1.bf16.xpose.msra.mxu0 0
  %216 = vmatprep.subr.bf16.mxu0 0
  %217 = vmatpush1.bf16.xpose.msra.mxu0 0
  %218 = vmatprep.subr.bf16.mxu0 0
  %219 = vmatpush1.bf16.xpose.msra.mxu0 0
  %220 = vmatprep.subr.bf16.mxu0 0
  %221 = vmatpush1.bf16.xpose.msra.mxu0 0
  %222 = vmatprep.subr.bf16.mxu0 0
  %223 = vmatpush1.bf16.xpose.msra.mxu0 %v206
  %224 = vmatprep.subr.bf16.mxu0 0
  %225 = vmatpush2.bf16.xpose.msra.mxu0 0
  %226 = vmatprep.subr.bf16.mxu0 0
  %227 = vmatpush2.bf16.xpose.msra.mxu0 0
  %228 = vmatprep.subr.bf16.mxu0 0
  %229 = vmatpush2.bf16.xpose.msra.mxu0 0
  %230 = vmatprep.subr.bf16.mxu0 0
  %231 = vmatpush2.bf16.xpose.msra.mxu0 0
  %232 = vmatprep.subr.bf16.mxu0 0
  %233 = vmatpush2.bf16.xpose.msra.mxu0 0
  %234 = vmatprep.subr.bf16.mxu0 0
  %235 = vmatpush2.bf16.xpose.msra.mxu0 0
  %236 = vmatprep.subr.bf16.mxu0 0
  %237 = vmatpush2.bf16.xpose.msra.mxu0 0
  %238 = vmatprep.subr.bf16.mxu0 0
  %239 = vmatpush2.bf16.xpose.msra.mxu0 0
  %240 = vmatprep.mubr.bf16.mxu0 0
  %241 = vmatmul.mubr.bf16.gmra.mxu0 %v203
  %v242 = vpop.f32.mrf.mxu0
  %v243 = vadd.f32 0.0, %v242
  %v244 = vpop.f32.mrf.mxu0
  %v245 = vpop.f32.mrf.mxu0
  %v246 = vpop.f32.mrf.mxu0
  %247 = vdwg.mxu0
  %v249 = vsel %vm63, %v27, 0
  %v252 = vsel %vm63, %v43, 0
  %254 = vmatprep.subr.bf16.mxu0 0
  %255 = vmatpush1.bf16.xpose.msra.mxu0 0
  %256 = vmatprep.subr.bf16.mxu0 0
  %257 = vmatpush1.bf16.xpose.msra.mxu0 0
  %258 = vmatprep.subr.bf16.mxu0 0
  %259 = vmatpush1.bf16.xpose.msra.mxu0 0
  %260 = vmatprep.subr.bf16.mxu0 0
  %261 = vmatpush1.bf16.xpose.msra.mxu0 0
  %262 = vmatprep.subr.bf16.mxu0 0
  %263 = vmatpush1.bf16.xpose.msra.mxu0 0
  %264 = vmatprep.subr.bf16.mxu0 0
  %265 = vmatpush1.bf16.xpose.msra.mxu0 0
  %266 = vmatprep.subr.bf16.mxu0 0
  %267 = vmatpush1.bf16.xpose.msra.mxu0 0
  %268 = vmatprep.subr.bf16.mxu0 0
  %269 = vmatpush1.bf16.xpose.msra.mxu0 %v252
  %270 = vmatprep.subr.bf16.mxu0 0
  %271 = vmatpush2.bf16.xpose.msra.mxu0 0
  %272 = vmatprep.subr.bf16.mxu0 0
  %273 = vmatpush2.bf16.xpose.msra.mxu0 0
  %274 = vmatprep.subr.bf16.mxu0 0
  %275 = vmatpush2.bf16.xpose.msra.mxu0 0
  %276 = vmatprep.subr.bf16.mxu0 0
  %277 = vmatpush2.bf16.xpose.msra.mxu0 0
  %278 = vmatprep.subr.bf16.mxu0 0
  %279 = vmatpush2.bf16.xpose.msra.mxu0 0
  %280 = vmatprep.subr.bf16.mxu0 0
  %281 = vmatpush2.bf16.xpose.msra.mxu0 0
  %282 = vmatprep.subr.bf16.mxu0 0
  %283 = vmatpush2.bf16.xpose.msra.mxu0 0
  %284 = vmatprep.subr.bf16.mxu0 0
  %285 = vmatpush2.bf16.xpose.msra.mxu0 0
  %286 = vmatprep.mubr.bf16.mxu0 0
  %287 = vmatmul.mubr.bf16.gmra.mxu0 %v249
  %v288 = vpop.f32.mrf.mxu0
  %v289 = vadd.f32 0.0, %v288
  %v290 = vpop.f32.mrf.mxu0
  %v291 = vpop.f32.mrf.mxu0
  %v292 = vpop.f32.mrf.mxu0
  %293 = vdwg.mxu0
  %v295 = vsel %vm63, %v28, 0
  %v298 = vsel %vm63, %v44, 0
  %300 = vmatprep.subr.bf16.mxu0 0
  %301 = vmatpush1.bf16.xpose.msra.mxu0 0
  %302 = vmatprep.subr.bf16.mxu0 0
  %303 = vmatpush1.bf16.xpose.msra.mxu0 0
  %304 = vmatprep.subr.bf16.mxu0 0
  %305 = vmatpush1.bf16.xpose.msra.mxu0 0
  %306 = vmatprep.subr.bf16.mxu0 0
  %307 = vmatpush1.bf16.xpose.msra.mxu0 0
  %308 = vmatprep.subr.bf16.mxu0 0
  %309 = vmatpush1.bf16.xpose.msra.mxu0 0
  %310 = vmatprep.subr.bf16.mxu0 0
  %311 = vmatpush1.bf16.xpose.msra.mxu0 0
  %312 = vmatprep.subr.bf16.mxu0 0
  %313 = vmatpush1.bf16.xpose.msra.mxu0 0
  %314 = vmatprep.subr.bf16.mxu0 0
  %315 = vmatpush1.bf16.xpose.msra.mxu0 %v298
  %316 = vmatprep.subr.bf16.mxu0 0
  %317 = vmatpush2.bf16.xpose.msra.mxu0 0
  %318 = vmatprep.subr.bf16.mxu0 0
  %319 = vmatpush2.bf16.xpose.msra.mxu0 0
  %320 = vmatprep.subr.bf16.mxu0 0
  %321 = vmatpush2.bf16.xpose.msra.mxu0 0
  %322 = vmatprep.subr.bf16.mxu0 0
  %323 = vmatpush2.bf16.xpose.msra.mxu0 0
  %324 = vmatprep.subr.bf16.mxu0 0
  %325 = vmatpush2.bf16.xpose.msra.mxu0 0
  %326 = vmatprep.subr.bf16.mxu0 0
  %327 = vmatpush2.bf16.xpose.msra.mxu0 0
  %328 = vmatprep.subr.bf16.mxu0 0
  %329 = vmatpush2.bf16.xpose.msra.mxu0 0
  %330 = vmatprep.subr.bf16.mxu0 0
  %331 = vmatpush2.bf16.xpose.msra.mxu0 0
  %332 = vmatprep.mubr.bf16.mxu0 0
  %333 = vmatmul.mubr.bf16.gmra.mxu0 %v295
  %v334 = vpop.f32.mrf.mxu0
  %v335 = vadd.f32 0.0, %v334
  %v336 = vpop.f32.mrf.mxu0
  %v337 = vpop.f32.mrf.mxu0
  %v338 = vpop.f32.mrf.mxu0
  %339 = vdwg.mxu0
  %v341 = vsel %vm63, %v29, 0
  %v344 = vsel %vm63, %v45, 0
  %346 = vmatprep.subr.bf16.mxu0 0
  %347 = vmatpush1.bf16.xpose.msra.mxu0 0
  %348 = vmatprep.subr.bf16.mxu0 0
  %349 = vmatpush1.bf16.xpose.msra.mxu0 0
  %350 = vmatprep.subr.bf16.mxu0 0
  %351 = vmatpush1.bf16.xpose.msra.mxu0 0
  %352 = vmatprep.subr.bf16.mxu0 0
  %353 = vmatpush1.bf16.xpose.msra.mxu0 0
  %354 = vmatprep.subr.bf16.mxu0 0
  %355 = vmatpush1.bf16.xpose.msra.mxu0 0
  %356 = vmatprep.subr.bf16.mxu0 0
  %357 = vmatpush1.bf16.xpose.msra.mxu0 0
  %358 = vmatprep.subr.bf16.mxu0 0
  %359 = vmatpush1.bf16.xpose.msra.mxu0 0
  %360 = vmatprep.subr.bf16.mxu0 0
  %361 = vmatpush1.bf16.xpose.msra.mxu0 %v344
  %362 = vmatprep.subr.bf16.mxu0 0
  %363 = vmatpush2.bf16.xpose.msra.mxu0 0
  %364 = vmatprep.subr.bf16.mxu0 0
  %365 = vmatpush2.bf16.xpose.msra.mxu0 0
  %366 = vmatprep.subr.bf16.mxu0 0
  %367 = vmatpush2.bf16.xpose.msra.mxu0 0
  %368 = vmatprep.subr.bf16.mxu0 0
  %369 = vmatpush2.bf16.xpose.msra.mxu0 0
  %370 = vmatprep.subr.bf16.mxu0 0
  %371 = vmatpush2.bf16.xpose.msra.mxu0 0
  %372 = vmatprep.subr.bf16.mxu0 0
  %373 = vmatpush2.bf16.xpose.msra.mxu0 0
  %374 = vmatprep.subr.bf16.mxu0 0
  %375 = vmatpush2.bf16.xpose.msra.mxu0 0
  %376 = vmatprep.subr.bf16.mxu0 0
  %377 = vmatpush2.bf16.xpose.msra.mxu0 0
  %378 = vmatprep.mubr.bf16.mxu0 0
  %379 = vmatmul.mubr.bf16.gmra.mxu0 %v341
  %v380 = vpop.f32.mrf.mxu0
  %v381 = vadd.f32 0.0, %v380
  %v382 = vpop.f32.mrf.mxu0
  %v383 = vpop.f32.mrf.mxu0
  %v384 = vpop.f32.mrf.mxu0
  %385 = vdwg.mxu0
  %v387 = vsel %vm63, %v30, 0
  %v390 = vsel %vm63, %v46, 0
  %392 = vmatprep.subr.bf16.mxu0 0
  %393 = vmatpush1.bf16.xpose.msra.mxu0 0
  %394 = vmatprep.subr.bf16.mxu0 0
  %395 = vmatpush1.bf16.xpose.msra.mxu0 0
  %396 = vmatprep.subr.bf16.mxu0 0
  %397 = vmatpush1.bf16.xpose.msra.mxu0 0
  %398 = vmatprep.subr.bf16.mxu0 0
  %399 = vmatpush1.bf16.xpose.msra.mxu0 0
  %400 = vmatprep.subr.bf16.mxu0 0
  %401 = vmatpush1.bf16.xpose.msra.mxu0 0
  %402 = vmatprep.subr.bf16.mxu0 0
  %403 = vmatpush1.bf16.xpose.msra.mxu0 0
  %404 = vmatprep.subr.bf16.mxu0 0
  %405 = vmatpush1.bf16.xpose.msra.mxu0 0
  %406 = vmatprep.subr.bf16.mxu0 0
  %407 = vmatpush1.bf16.xpose.msra.mxu0 %v390
  %408 = vmatprep.subr.bf16.mxu0 0
  %409 = vmatpush2.bf16.xpose.msra.mxu0 0
  %410 = vmatprep.subr.bf16.mxu0 0
  %411 = vmatpush2.bf16.xpose.msra.mxu0 0
  %412 = vmatprep.subr.bf16.mxu0 0
  %413 = vmatpush2.bf16.xpose.msra.mxu0 0
  %414 = vmatprep.subr.bf16.mxu0 0
  %415 = vmatpush2.bf16.xpose.msra.mxu0 0
  %416 = vmatprep.subr.bf16.mxu0 0
  %417 = vmatpush2.bf16.xpose.msra.mxu0 0
  %418 = vmatprep.subr.bf16.mxu0 0
  %419 = vmatpush2.bf16.xpose.msra.mxu0 0
  %420 = vmatprep.subr.bf16.mxu0 0
  %421 = vmatpush2.bf16.xpose.msra.mxu0 0
  %422 = vmatprep.subr.bf16.mxu0 0
  %423 = vmatpush2.bf16.xpose.msra.mxu0 0
  %424 = vmatprep.mubr.bf16.mxu0 0
  %425 = vmatmul.mubr.bf16.gmra.mxu0 %v387
  %v426 = vpop.f32.mrf.mxu0
  %v427 = vadd.f32 0.0, %v426
  %v428 = vpop.f32.mrf.mxu0
  %v429 = vpop.f32.mrf.mxu0
  %v430 = vpop.f32.mrf.mxu0
  %431 = vdwg.mxu0
  %v432 = vsel %vm63, %v105, -inf
  %433 = vmax.xlane.f32.xlu0 %v432
  %v434 = vpop.xlane.xlu0 %433
  %v435 = vsel %vm63, %v151, -inf
  %436 = vmax.xlane.f32.xlu0 %v435
  %v437 = vpop.xlane.xlu0 %436
  %v438 = vsel %vm63, %v197, -inf
  %439 = vmax.xlane.f32.xlu0 %v438
  %v440 = vpop.xlane.xlu0 %439
  %v441 = vsel %vm63, %v243, -inf
  %442 = vmax.xlane.f32.xlu0 %v441
  %v443 = vpop.xlane.xlu0 %442
  %v444 = vsel %vm63, %v289, -inf
  %445 = vmax.xlane.f32.xlu0 %v444
  %v446 = vpop.xlane.xlu0 %445
  %v447 = vsel %vm63, %v335, -inf
  %448 = vmax.xlane.f32.xlu0 %v447
  %v449 = vpop.xlane.xlu0 %448
  %v450 = vsel %vm63, %v381, -inf
  %451 = vmax.xlane.f32.xlu0 %v450
  %v452 = vpop.xlane.xlu0 %451
  %v453 = vsel %vm63, %v427, -inf
  %454 = vmax.xlane.f32.xlu0 %v453
  %v455 = vpop.xlane.xlu0 %454
  %v456 = vsub.f32 %v105, %v434
  %v457 = vsub.f32 %v151, %v437
  %v458 = vsub.f32 %v197, %v440
  %v459 = vsub.f32 %v243, %v443
  %v460 = vsub.f32 %v289, %v446
  %v461 = vsub.f32 %v335, %v449
  %v462 = vsub.f32 %v381, %v452
  %v463 = vsub.f32 %v427, %v455
  %v464 = vmul.f32 %v456, 1.442695
  %v465 = vpow.pop %v464
  %v466 = vmul.f32 %v457, 1.442695
  %v467 = vpow.pop %v466
  %v468 = vmul.f32 %v458, 1.442695
  %v469 = vpow.pop %v468
  %v470 = vmul.f32 %v459, 1.442695
  %v471 = vpow.pop %v470
  %v472 = vmul.f32 %v460, 1.442695
  %v473 = vpow.pop %v472
  %v474 = vmul.f32 %v461, 1.442695
  %v475 = vpow.pop %v474
  %v476 = vmul.f32 %v462, 1.442695
  %v477 = vpow.pop %v476
  %v478 = vmul.f32 %v463, 1.442695
  %v479 = vpow.pop %v478
  %v480 = vsel %vm63, %v465, 0.0
  %481 = vadd.xlane.f32.xlu0 %v480
  %v482 = vpop.xlane.xlu0 %481
  %v483 = vsel %vm63, %v467, 0.0
  %484 = vadd.xlane.f32.xlu0 %v483
  %v485 = vpop.xlane.xlu0 %484
  %v486 = vsel %vm63, %v469, 0.0
  %487 = vadd.xlane.f32.xlu0 %v486
  %v488 = vpop.xlane.xlu0 %487
  %v489 = vsel %vm63, %v471, 0.0
  %490 = vadd.xlane.f32.xlu0 %v489
  %v491 = vpop.xlane.xlu0 %490
  %v492 = vsel %vm63, %v473, 0.0
  %493 = vadd.xlane.f32.xlu0 %v492
  %v494 = vpop.xlane.xlu0 %493
  %v495 = vsel %vm63, %v475, 0.0
  %496 = vadd.xlane.f32.xlu0 %v495
  %v497 = vpop.xlane.xlu0 %496
  %v498 = vsel %vm63, %v477, 0.0
  %499 = vadd.xlane.f32.xlu0 %v498
  %v500 = vpop.xlane.xlu0 %499
  %v501 = vsel %vm63, %v479, 0.0
  %502 = vadd.xlane.f32.xlu0 %v501
  %v503 = vpop.xlane.xlu0 %502
  %v504 = vrcp.pop %v482
  %v505 = vmul.f32 %v465, %v504
  %v506 = vrcp.pop %v485
  %v507 = vmul.f32 %v467, %v506
  %v508 = vrcp.pop %v488
  %v509 = vmul.f32 %v469, %v508
  %v510 = vrcp.pop %v491
  %v511 = vmul.f32 %v471, %v510
  %v512 = vrcp.pop %v494
  %v513 = vmul.f32 %v473, %v512
  %v514 = vrcp.pop %v497
  %v515 = vmul.f32 %v475, %v514
  %v516 = vrcp.pop %v500
  %v517 = vmul.f32 %v477, %v516
  %v518 = vrcp.pop %v503
  %v519 = vmul.f32 %v479, %v518
  %v520 = vpack.c.bf16 %v505, %v505
  %v521 = vpack.c.bf16 %v507, %v507
  %v522 = vpack.c.bf16 %v509, %v509
  %v523 = vpack.c.bf16 %v511, %v511
  %v524 = vpack.c.bf16 %v513, %v513
  %v525 = vpack.c.bf16 %v515, %v515
  %v526 = vpack.c.bf16 %v517, %v517
  %v527 = vpack.c.bf16 %v519, %v519
  %v529 = vsel %vm63, %v520, 0
  %vm531 = vcmask 1043456
  %v533 = vsel %vm531, %v55, 0
  %535 = vmatprep.subr.bf16.mxu0 0
  %536 = vmatpush1.bf16.msra.mxu0 0
  %537 = vmatprep.subr.bf16.mxu0 0
  %538 = vmatpush1.bf16.msra.mxu0 0
  %539 = vmatprep.subr.bf16.mxu0 0
  %540 = vmatpush1.bf16.msra.mxu0 0
  %541 = vmatprep.subr.bf16.mxu0 0
  %542 = vmatpush1.bf16.msra.mxu0 0
  %543 = vmatprep.subr.bf16.mxu0 0
  %544 = vmatpush1.bf16.msra.mxu0 0
  %545 = vmatprep.subr.bf16.mxu0 0
  %546 = vmatpush1.bf16.msra.mxu0 0
  %547 = vmatprep.subr.bf16.mxu0 0
  %548 = vmatpush1.bf16.msra.mxu0 0
  %549 = vmatprep.subr.bf16.mxu0 0
  %550 = vmatpush1.bf16.msra.mxu0 %v533
  %551 = vmatprep.subr.bf16.mxu0 0
  %552 = vmatpush2.bf16.msra.mxu0 0
  %553 = vmatprep.subr.bf16.mxu0 0
  %554 = vmatpush2.bf16.msra.mxu0 0
  %555 = vmatprep.subr.bf16.mxu0 0
  %556 = vmatpush2.bf16.msra.mxu0 0
  %557 = vmatprep.subr.bf16.mxu0 0
  %558 = vmatpush2.bf16.msra.mxu0 0
  %559 = vmatprep.subr.bf16.mxu0 0
  %560 = vmatpush2.bf16.msra.mxu0 0
  %561 = vmatprep.subr.bf16.mxu0 0
  %562 = vmatpush2.bf16.msra.mxu0 0
  %563 = vmatprep.subr.bf16.mxu0 0
  %564 = vmatpush2.bf16.msra.mxu0 0
  %565 = vmatprep.subr.bf16.mxu0 0
  %566 = vmatpush2.bf16.msra.mxu0 0
  %567 = vmatprep.mubr.bf16.mxu0 0
  %568 = vmatmul.mubr.bf16.gmra.mxu0 %v529
  %v569 = vpop.f32.mrf.mxu0
  %v570 = vadd.f32 0.0, %v569
  %v571 = vpop.f32.mrf.mxu0
  %v572 = vpop.f32.mrf.mxu0
  %v573 = vpop.f32.mrf.mxu0
  %574 = vdwg.mxu0
  %v576 = vsel %vm63, %v521, 0
  %v579 = vsel %vm531, %v56, 0
  %581 = vmatprep.subr.bf16.mxu0 0
  %582 = vmatpush1.bf16.msra.mxu0 0
  %583 = vmatprep.subr.bf16.mxu0 0
  %584 = vmatpush1.bf16.msra.mxu0 0
  %585 = vmatprep.subr.bf16.mxu0 0
  %586 = vmatpush1.bf16.msra.mxu0 0
  %587 = vmatprep.subr.bf16.mxu0 0
  %588 = vmatpush1.bf16.msra.mxu0 0
  %589 = vmatprep.subr.bf16.mxu0 0
  %590 = vmatpush1.bf16.msra.mxu0 0
  %591 = vmatprep.subr.bf16.mxu0 0
  %592 = vmatpush1.bf16.msra.mxu0 0
  %593 = vmatprep.subr.bf16.mxu0 0
  %594 = vmatpush1.bf16.msra.mxu0 0
  %595 = vmatprep.subr.bf16.mxu0 0
  %596 = vmatpush1.bf16.msra.mxu0 %v579
  %597 = vmatprep.subr.bf16.mxu0 0
  %598 = vmatpush2.bf16.msra.mxu0 0
  %599 = vmatprep.subr.bf16.mxu0 0
  %600 = vmatpush2.bf16.msra.mxu0 0
  %601 = vmatprep.subr.bf16.mxu0 0
  %602 = vmatpush2.bf16.msra.mxu0 0
  %603 = vmatprep.subr.bf16.mxu0 0
  %604 = vmatpush2.bf16.msra.mxu0 0
  %605 = vmatprep.subr.bf16.mxu0 0
  %606 = vmatpush2.bf16.msra.mxu0 0
  %607 = vmatprep.subr.bf16.mxu0 0
  %608 = vmatpush2.bf16.msra.mxu0 0
  %609 = vmatprep.subr.bf16.mxu0 0
  %610 = vmatpush2.bf16.msra.mxu0 0
  %611 = vmatprep.subr.bf16.mxu0 0
  %612 = vmatpush2.bf16.msra.mxu0 0
  %613 = vmatprep.mubr.bf16.mxu0 0
  %614 = vmatmul.mubr.bf16.gmra.mxu0 %v576
  %v615 = vpop.f32.mrf.mxu0
  %v616 = vadd.f32 0.0, %v615
  %v617 = vpop.f32.mrf.mxu0
  %v618 = vpop.f32.mrf.mxu0
  %v619 = vpop.f32.mrf.mxu0
  %620 = vdwg.mxu0
  %v622 = vsel %vm63, %v522, 0
  %v625 = vsel %vm531, %v57, 0
  %627 = vmatprep.subr.bf16.mxu0 0
  %628 = vmatpush1.bf16.msra.mxu0 0
  %629 = vmatprep.subr.bf16.mxu0 0
  %630 = vmatpush1.bf16.msra.mxu0 0
  %631 = vmatprep.subr.bf16.mxu0 0
  %632 = vmatpush1.bf16.msra.mxu0 0
  %633 = vmatprep.subr.bf16.mxu0 0
  %634 = vmatpush1.bf16.msra.mxu0 0
  %635 = vmatprep.subr.bf16.mxu0 0
  %636 = vmatpush1.bf16.msra.mxu0 0
  %637 = vmatprep.subr.bf16.mxu0 0
  %638 = vmatpush1.bf16.msra.mxu0 0
  %639 = vmatprep.subr.bf16.mxu0 0
  %640 = vmatpush1.bf16.msra.mxu0 0
  %641 = vmatprep.subr.bf16.mxu0 0
  %642 = vmatpush1.bf16.msra.mxu0 %v625
  %643 = vmatprep.subr.bf16.mxu0 0
  %644 = vmatpush2.bf16.msra.mxu0 0
  %645 = vmatprep.subr.bf16.mxu0 0
  %646 = vmatpush2.bf16.msra.mxu0 0
  %647 = vmatprep.subr.bf16.mxu0 0
  %648 = vmatpush2.bf16.msra.mxu0 0
  %649 = vmatprep.subr.bf16.mxu0 0
  %650 = vmatpush2.bf16.msra.mxu0 0
  %651 = vmatprep.subr.bf16.mxu0 0
  %652 = vmatpush2.bf16.msra.mxu0 0
  %653 = vmatprep.subr.bf16.mxu0 0
  %654 = vmatpush2.bf16.msra.mxu0 0
  %655 = vmatprep.subr.bf16.mxu0 0
  %656 = vmatpush2.bf16.msra.mxu0 0
  %657 = vmatprep.subr.bf16.mxu0 0
  %658 = vmatpush2.bf16.msra.mxu0 0
  %659 = vmatprep.mubr.bf16.mxu0 0
  %660 = vmatmul.mubr.bf16.gmra.mxu0 %v622
  %v661 = vpop.f32.mrf.mxu0
  %v662 = vadd.f32 0.0, %v661
  %v663 = vpop.f32.mrf.mxu0
  %v664 = vpop.f32.mrf.mxu0
  %v665 = vpop.f32.mrf.mxu0
  %666 = vdwg.mxu0
  %v668 = vsel %vm63, %v523, 0
  %v671 = vsel %vm531, %v58, 0
  %673 = vmatprep.subr.bf16.mxu0 0
  %674 = vmatpush1.bf16.msra.mxu0 0
  %675 = vmatprep.subr.bf16.mxu0 0
  %676 = vmatpush1.bf16.msra.mxu0 0
  %677 = vmatprep.subr.bf16.mxu0 0
  %678 = vmatpush1.bf16.msra.mxu0 0
  %679 = vmatprep.subr.bf16.mxu0 0
  %680 = vmatpush1.bf16.msra.mxu0 0
  %681 = vmatprep.subr.bf16.mxu0 0
  %682 = vmatpush1.bf16.msra.mxu0 0
  %683 = vmatprep.subr.bf16.mxu0 0
  %684 = vmatpush1.bf16.msra.mxu0 0
  %685 = vmatprep.subr.bf16.mxu0 0
  %686 = vmatpush1.bf16.msra.mxu0 0
  %687 = vmatprep.subr.bf16.mxu0 0
  %688 = vmatpush1.bf16.msra.mxu0 %v671
  %689 = vmatprep.subr.bf16.mxu0 0
  %690 = vmatpush2.bf16.msra.mxu0 0
  %691 = vmatprep.subr.bf16.mxu0 0
  %692 = vmatpush2.bf16.msra.mxu0 0
  %693 = vmatprep.subr.bf16.mxu0 0
  %694 = vmatpush2.bf16.msra.mxu0 0
  %695 = vmatprep.subr.bf16.mxu0 0
  %696 = vmatpush2.bf16.msra.mxu0 0
  %697 = vmatprep.subr.bf16.mxu0 0
  %698 = vmatpush2.bf16.msra.mxu0 0
  %699 = vmatprep.subr.bf16.mxu0 0
  %700 = vmatpush2.bf16.msra.mxu0 0
  %701 = vmatprep.subr.bf16.mxu0 0
  %702 = vmatpush2.bf16.msra.mxu0 0
  %703 = vmatprep.subr.bf16.mxu0 0
  %704 = vmatpush2.bf16.msra.mxu0 0
  %705 = vmatprep.mubr.bf16.mxu0 0
  %706 = vmatmul.mubr.bf16.gmra.mxu0 %v668
  %v707 = vpop.f32.mrf.mxu0
  %v708 = vadd.f32 0.0, %v707
  %v709 = vpop.f32.mrf.mxu0
  %v710 = vpop.f32.mrf.mxu0
  %v711 = vpop.f32.mrf.mxu0
  %712 = vdwg.mxu0
  %v714 = vsel %vm63, %v524, 0
  %v717 = vsel %vm531, %v59, 0
  %719 = vmatprep.subr.bf16.mxu0 0
  %720 = vmatpush1.bf16.msra.mxu0 0
  %721 = vmatprep.subr.bf16.mxu0 0
  %722 = vmatpush1.bf16.msra.mxu0 0
  %723 = vmatprep.subr.bf16.mxu0 0
  %724 = vmatpush1.bf16.msra.mxu0 0
  %725 = vmatprep.subr.bf16.mxu0 0
  %726 = vmatpush1.bf16.msra.mxu0 0
  %727 = vmatprep.subr.bf16.mxu0 0
  %728 = vmatpush1.bf16.msra.mxu0 0
  %729 = vmatprep.subr.bf16.mxu0 0
  %730 = vmatpush1.bf16.msra.mxu0 0
  %731 = vmatprep.subr.bf16.mxu0 0
  %732 = vmatpush1.bf16.msra.mxu0 0
  %733 = vmatprep.subr.bf16.mxu0 0
  %734 = vmatpush1.bf16.msra.mxu0 %v717
  %735 = vmatprep.subr.bf16.mxu0 0
  %736 = vmatpush2.bf16.msra.mxu0 0
  %737 = vmatprep.subr.bf16.mxu0 0
  %738 = vmatpush2.bf16.msra.mxu0 0
  %739 = vmatprep.subr.bf16.mxu0 0
  %740 = vmatpush2.bf16.msra.mxu0 0
  %741 = vmatprep.subr.bf16.mxu0 0
  %742 = vmatpush2.bf16.msra.mxu0 0
  %743 = vmatprep.subr.bf16.mxu0 0
  %744 = vmatpush2.bf16.msra.mxu0 0
  %745 = vmatprep.subr.bf16.mxu0 0
  %746 = vmatpush2.bf16.msra.mxu0 0
  %747 = vmatprep.subr.bf16.mxu0 0
  %748 = vmatpush2.bf16.msra.mxu0 0
  %749 = vmatprep.subr.bf16.mxu0 0
  %750 = vmatpush2.bf16.msra.mxu0 0
  %751 = vmatprep.mubr.bf16.mxu0 0
  %752 = vmatmul.mubr.bf16.gmra.mxu0 %v714
  %v753 = vpop.f32.mrf.mxu0
  %v754 = vadd.f32 0.0, %v753
  %v755 = vpop.f32.mrf.mxu0
  %v756 = vpop.f32.mrf.mxu0
  %v757 = vpop.f32.mrf.mxu0
  %758 = vdwg.mxu0
  %v760 = vsel %vm63, %v525, 0
  %v763 = vsel %vm531, %v60, 0
  %765 = vmatprep.subr.bf16.mxu0 0
  %766 = vmatpush1.bf16.msra.mxu0 0
  %767 = vmatprep.subr.bf16.mxu0 0
  %768 = vmatpush1.bf16.msra.mxu0 0
  %769 = vmatprep.subr.bf16.mxu0 0
  %770 = vmatpush1.bf16.msra.mxu0 0
  %771 = vmatprep.subr.bf16.mxu0 0
  %772 = vmatpush1.bf16.msra.mxu0 0
  %773 = vmatprep.subr.bf16.mxu0 0
  %774 = vmatpush1.bf16.msra.mxu0 0
  %775 = vmatprep.subr.bf16.mxu0 0
  %776 = vmatpush1.bf16.msra.mxu0 0
  %777 = vmatprep.subr.bf16.mxu0 0
  %778 = vmatpush1.bf16.msra.mxu0 0
  %779 = vmatprep.subr.bf16.mxu0 0
  %780 = vmatpush1.bf16.msra.mxu0 %v763
  %781 = vmatprep.subr.bf16.mxu0 0
  %782 = vmatpush2.bf16.msra.mxu0 0
  %783 = vmatprep.subr.bf16.mxu0 0
  %784 = vmatpush2.bf16.msra.mxu0 0
  %785 = vmatprep.subr.bf16.mxu0 0
  %786 = vmatpush2.bf16.msra.mxu0 0
  %787 = vmatprep.subr.bf16.mxu0 0
  %788 = vmatpush2.bf16.msra.mxu0 0
  %789 = vmatprep.subr.bf16.mxu0 0
  %790 = vmatpush2.bf16.msra.mxu0 0
  %791 = vmatprep.subr.bf16.mxu0 0
  %792 = vmatpush2.bf16.msra.mxu0 0
  %793 = vmatprep.subr.bf16.mxu0 0
  %794 = vmatpush2.bf16.msra.mxu0 0
  %795 = vmatprep.subr.bf16.mxu0 0
  %796 = vmatpush2.bf16.msra.mxu0 0
  %797 = vmatprep.mubr.bf16.mxu0 0
  %798 = vmatmul.mubr.bf16.gmra.mxu0 %v760
  %v799 = vpop.f32.mrf.mxu0
  %v800 = vadd.f32 0.0, %v799
  %v801 = vpop.f32.mrf.mxu0
  %v802 = vpop.f32.mrf.mxu0
  %v803 = vpop.f32.mrf.mxu0
  %804 = vdwg.mxu0
  %v806 = vsel %vm63, %v526, 0
  %v809 = vsel %vm531, %v61, 0
  %811 = vmatprep.subr.bf16.mxu0 0
  %812 = vmatpush1.bf16.msra.mxu0 0
  %813 = vmatprep.subr.bf16.mxu0 0
  %814 = vmatpush1.bf16.msra.mxu0 0
  %815 = vmatprep.subr.bf16.mxu0 0
  %816 = vmatpush1.bf16.msra.mxu0 0
  %817 = vmatprep.subr.bf16.mxu0 0
  %818 = vmatpush1.bf16.msra.mxu0 0
  %819 = vmatprep.subr.bf16.mxu0 0
  %820 = vmatpush1.bf16.msra.mxu0 0
  %821 = vmatprep.subr.bf16.mxu0 0
  %822 = vmatpush1.bf16.msra.mxu0 0
  %823 = vmatprep.subr.bf16.mxu0 0
  %824 = vmatpush1.bf16.msra.mxu0 0
  %825 = vmatprep.subr.bf16.mxu0 0
  %826 = vmatpush1.bf16.msra.mxu0 %v809
  %827 = vmatprep.subr.bf16.mxu0 0
  %828 = vmatpush2.bf16.msra.mxu0 0
  %829 = vmatprep.subr.bf16.mxu0 0
  %830 = vmatpush2.bf16.msra.mxu0 0
  %831 = vmatprep.subr.bf16.mxu0 0
  %832 = vmatpush2.bf16.msra.mxu0 0
  %833 = vmatprep.subr.bf16.mxu0 0
  %834 = vmatpush2.bf16.msra.mxu0 0
  %835 = vmatprep.subr.bf16.mxu0 0
  %836 = vmatpush2.bf16.msra.mxu0 0
  %837 = vmatprep.subr.bf16.mxu0 0
  %838 = vmatpush2.bf16.msra.mxu0 0
  %839 = vmatprep.subr.bf16.mxu0 0
  %840 = vmatpush2.bf16.msra.mxu0 0
  %841 = vmatprep.subr.bf16.mxu0 0
  %842 = vmatpush2.bf16.msra.mxu0 0
  %843 = vmatprep.mubr.bf16.mxu0 0
  %844 = vmatmul.mubr.bf16.gmra.mxu0 %v806
  %v845 = vpop.f32.mrf.mxu0
  %v846 = vadd.f32 0.0, %v845
  %v847 = vpop.f32.mrf.mxu0
  %v848 = vpop.f32.mrf.mxu0
  %v849 = vpop.f32.mrf.mxu0
  %850 = vdwg.mxu0
  %v852 = vsel %vm63, %v527, 0
  %v855 = vsel %vm531, %v62, 0
  %857 = vmatprep.subr.bf16.mxu0 0
  %858 = vmatpush1.bf16.msra.mxu0 0
  %859 = vmatprep.subr.bf16.mxu0 0
  %860 = vmatpush1.bf16.msra.mxu0 0
  %861 = vmatprep.subr.bf16.mxu0 0
  %862 = vmatpush1.bf16.msra.mxu0 0
  %863 = vmatprep.subr.bf16.mxu0 0
  %864 = vmatpush1.bf16.msra.mxu0 0
  %865 = vmatprep.subr.bf16.mxu0 0
  %866 = vmatpush1.bf16.msra.mxu0 0
  %867 = vmatprep.subr.bf16.mxu0 0
  %868 = vmatpush1.bf16.msra.mxu0 0
  %869 = vmatprep.subr.bf16.mxu0 0
  %870 = vmatpush1.bf16.msra.mxu0 0
  %871 = vmatprep.subr.bf16.mxu0 0
  %872 = vmatpush1.bf16.msra.mxu0 %v855
  %873 = vmatprep.subr.bf16.mxu0 0
  %874 = vmatpush2.bf16.msra.mxu0 0
  %875 = vmatprep.subr.bf16.mxu0 0
  %876 = vmatpush2.bf16.msra.mxu0 0
  %877 = vmatprep.subr.bf16.mxu0 0
  %878 = vmatpush2.bf16.msra.mxu0 0
  %879 = vmatprep.subr.bf16.mxu0 0
  %880 = vmatpush2.bf16.msra.mxu0 0
  %881 = vmatprep.subr.bf16.mxu0 0
  %882 = vmatpush2.bf16.msra.mxu0 0
  %883 = vmatprep.subr.bf16.mxu0 0
  %884 = vmatpush2.bf16.msra.mxu0 0
  %885 = vmatprep.subr.bf16.mxu0 0
  %886 = vmatpush2.bf16.msra.mxu0 0
  %887 = vmatprep.subr.bf16.mxu0 0
  %888 = vmatpush2.bf16.msra.mxu0 0
  %889 = vmatprep.mubr.bf16.mxu0 0
  %890 = vmatmul.mubr.bf16.gmra.mxu0 %v852
  %v891 = vpop.f32.mrf.mxu0
  %v892 = vadd.f32 0.0, %v891
  %v893 = vpop.f32.mrf.mxu0
  %v894 = vpop.f32.mrf.mxu0
  %v895 = vpop.f32.mrf.mxu0
  %896 = vdwg.mxu0
  %897 = vst.msk [vmem:[%s3] sm:$0xff] %vm63, %v570
  %898 = vst.msk [vmem:[%s3 + $0x8] sm:$0xff] %vm63, %v616
  %899 = vst.msk [vmem:[%s3 + $0x10] sm:$0xff] %vm63, %v662
  %900 = vst.msk [vmem:[%s3 + $0x18] sm:$0xff] %vm63, %v708
  %901 = vst.msk [vmem:[%s3 + $0x20] sm:$0xff] %vm63, %v754
  %902 = vst.msk [vmem:[%s3 + $0x28] sm:$0xff] %vm63, %v800
  %903 = vst.msk [vmem:[%s3 + $0x30] sm:$0xff] %vm63, %v846
  %904 = vst.msk [vmem:[%s3 + $0x38] sm:$0xff] %vm63, %v892
  // Predicated region
  $region14: #{encoder_forward.4} parent=0 // pred_check
    _
  $region15: #{encoder_forward.4} parent=0 // pred_check_branch
    %906 = sbr.rel (0) target = $region17
  $region16: #{encoder_forward.4} parent=0 // pred_region
    _
  $region17: #{encoder_forward.4} parent=0 // pred_fallthru
    _
  // Predicated region
  $region18: #{encoder_forward.4} parent=0 // pred_check
    _
  $region19: #{encoder_forward.4} parent=0 // pred_check_branch
    %908 = sbr.rel (0) target = $region21
  $region20: #{encoder_forward.4} parent=0 // pred_region
    _
  $region21: #{encoder_forward.4} parent=0 // pred_fallthru
    _

</llo_original>
